<compile_context>
chip_gen: v6e
topology: v6e:2x2x1
jax: 0.10.0
libtpu: 0.0.40
codegen_flags: <defaults>
</compile_context>

<pallas_src>
import jax
import jax.numpy as jnp
from jax.experimental import pallas as pl
from jax.experimental.pallas import tpu as pltpu

B = 2
POOL = 4
WINDOW = POOL * POOL                      # 16 pool-window elements
POOLED_H = 210 // POOL                    # 52 (floor mode)
POOLED_W = 160 // POOL                    # 40
IN_FEATURES = POOLED_H * POOLED_W         # 2080
K_PAD = 2304                              # 2080 zero-padded; multiple of 128 and 256
K_CHUNK = 768                             # 3 chunks; 768 = 6*128 = 3*256 (MXU/lane aligned)
N_CHUNKS = K_PAD // K_CHUNK               # 3 (small: each grid step costs ~0.35 us)
HIDDEN = 256
OUT = 6


def _pool_mlp_kernel(x_ref,
                     w1_ref, b1_ref,
                     w2_ref, b2_ref,
                     w3_ref, b3_ref,
                     w4_ref, b4_ref,
                     w5_ref, b5_ref,
                     out_ref, acc_ref):
    k = pl.program_id(0)

    @pl.when(k == 0)
    def _init():
        acc_ref[...] = jnp.zeros_like(acc_ref)

    # MaxPool2d(4): the 16 window elements sit on the dense, bf16-packed sublane axis;
    # the cross-sublane max goes to the XLU (idle here -> essentially free).
    pooled = jnp.max(x_ref[...], axis=1)                  # [B, K_CHUNK] bf16

    # Partial layer-1 matmul for this K chunk: bf16 x bf16 -> f32 accumulate on the MXU.
    acc_ref[...] += jnp.dot(pooled, w1_ref[...],
                            preferred_element_type=jnp.float32)

    @pl.when(k == pl.num_programs(0) - 1)
    def _finish():
        def dense(h, w_ref, b_ref, relu):
            z = jnp.dot(h.astype(w_ref.dtype), w_ref[...],
                        preferred_element_type=jnp.float32) + b_ref[...]
            return jnp.maximum(z, 0.0) if relu else z

        h = jnp.maximum(acc_ref[...] + b1_ref[...], 0.0)  # layer-1 bias + ReLU (f32)
        h = dense(h, w2_ref, b2_ref, True)
        h = dense(h, w3_ref, b3_ref, True)
        h = dense(h, w4_ref, b4_ref, True)
        out_ref[...] = dense(h, w5_ref, b5_ref, False).astype(out_ref.dtype)


@jax.jit
def neural_network_forward(x, params):
    """x: [B, 1, 210, 160] f32 (NCHW). params: [(W bf16 [in(+pad), out], b f32 [1, out])]*5.
    Returns logits [B, 6] f32."""
    b = x.shape[0]

    # ---- pure layout: crop, bf16 cast, window -> sublane axis, pad features to 2304 ----
    xc = x[:, 0, :POOLED_H * POOL, :].astype(jnp.bfloat16)        # [B, 208, 160] bf16
    xw = xc.reshape(b, POOLED_H, POOL, POOLED_W, POOL)            # [B, 52, 4, 40, 4]
    xw = jnp.transpose(xw, (0, 2, 4, 1, 3))                       # [B, 4, 4, 52, 40]
    xw = xw.reshape(b, WINDOW, IN_FEATURES)                       # [B, 16, 2080]
    xw = jnp.pad(xw, ((0, 0), (0, 0), (0, K_PAD - IN_FEATURES)))  # [B, 16, 2304]

    (w1, b1), (w2, b2), (w3, b3), (w4, b4), (w5, b5) = params
    args = (xw, w1, b1, w2, b2, w3, b3, w4, b4, w5, b5)
    n_in = len(args)

    def const_spec(arr):
        # Constant block index across the K-chunk grid -> fetched once, never re-DMA'd.
        return pl.BlockSpec(arr.shape, lambda k: (0, 0))

    grid_spec = pltpu.PrefetchScalarGridSpec(
        num_scalar_prefetch=0,
        grid=(N_CHUNKS,),
        in_specs=[
            pl.BlockSpec((b, WINDOW, K_CHUNK), lambda k: (0, 0, k)),   # x: K-chunked
            pl.BlockSpec((K_CHUNK, HIDDEN), lambda k: (k, 0)),         # w1: streamed K chunks
            const_spec(b1),
            const_spec(w2), const_spec(b2),
            const_spec(w3), const_spec(b3),
            const_spec(w4), const_spec(b4),
            const_spec(w5), const_spec(b5),
        ],
        out_specs=pl.BlockSpec((b, OUT), lambda k: (0, 0)),
        scratch_shapes=[pltpu.VMEM((b, HIDDEN), jnp.float32)],         # layer-1 accumulator
    )

    return pl.pallas_call(
        _pool_mlp_kernel,
        out_shape=jax.ShapeDtypeStruct((b, OUT), jnp.float32),
        grid_spec=grid_spec,
        compiler_params=pltpu.CompilerParams(
            # K-chunk axis carries the accumulator -> must be "arbitrary".
            dimension_semantics=("arbitrary",),
            # Let XLA fuse the crop/cast/transpose/pad producer into the x operand.
            allow_input_fusion=[True] + [False] * (n_in - 1),
        ),
        cost_estimate=pl.CostEstimate(
            flops=3_200_000, bytes_accessed=1_750_000, transcendentals=0),
    )(*args)


def init_params(key):
    """Deterministic params. Each Linear stored as (W [in, out], b [1, out]) in f32."""
    dims = [(IN_FEATURES, HIDDEN), (HIDDEN, HIDDEN), (HIDDEN, HIDDEN),
            (HIDDEN, HIDDEN), (HIDDEN, OUT)]
    params = []
    for fan_in, fan_out in dims:
        key, kw, kb = jax.random.split(key, 3)
        bound = 1.0 / jnp.sqrt(fan_in)
        w = jax.random.uniform(kw, (fan_in, fan_out), jnp.float32, -bound, bound)
        bias = jax.random.uniform(kb, (1, fan_out), jnp.float32, -bound, bound)
        params.append((w, bias))
    return params


def prepare_params(params):
    """One-time (outside the per-call forward):
      * cast weight matrices to bf16 (halves the dominant weight HBM->VMEM stream),
      * zero-pad w1's contraction dim 2080 -> 2304 (matches the padded pooled features,
        contributes exactly zero to the matmul).
    Biases stay f32 so the elementwise path stays f32 on all generations (incl. v5e)."""
    out = []
    for i, (w, bias) in enumerate(params):
        wq = w.astype(jnp.bfloat16)
        if i == 0:
            wq = jnp.pad(wq, ((0, K_PAD - IN_FEATURES), (0, 0)))
        out.append((wq, bias))
    return out


def reference_forward(x, params):
    """Pure-JAX f32 reference mirroring the PyTorch module exactly."""
    b = x.shape[0]
    xc = x[:, :, :POOLED_H * POOL, :].reshape(b, 1, POOLED_H, POOL, POOLED_W, POOL)
    pooled = jnp.max(xc, axis=(3, 5))                      # [B, 1, 52, 40]
    h = pooled.reshape(b, -1)
    for i, (w, bias) in enumerate(params):
        h = h @ w.astype(jnp.float32) + bias
        if i < len(params) - 1:
            h = jnp.maximum(h, 0.0)
    return h


if __name__ == "__main__":
    key = jax.random.PRNGKey(0)
    kx, kp = jax.random.split(key)
    x = jax.random.uniform(kx, (B, 1, 210, 160), jnp.float32)

    params_f32 = init_params(kp)
    params = prepare_params(params_f32)     # cast/pad once, outside the per-call forward

    out = neural_network_forward(x, params)
    out = jax.block_until_ready(out)

    ref = reference_forward(x, params_f32)  # module-exact f32 reference
    assert out.shape == (B, OUT)
    # bf16 weight/activation quantization => loosened tolerance vs the f32 reference.
    assert jnp.allclose(out, ref, atol=2e-2, rtol=2e-2), (out, ref)
    print("KERNEL_OK")
</pallas_src>

<mosaic_0001>
module attributes {stable_mosaic.version = 11 : i64} {
  func.func @_pool_mlp_kernel(%arg0: i32, %arg1: memref<2x16x768xbf16, #tpu.memory_space<vmem>>, %arg2: memref<768x256xbf16, #tpu.memory_space<vmem>>, %arg3: memref<1x256xf32, #tpu.memory_space<vmem>>, %arg4: memref<256x256xbf16, #tpu.memory_space<vmem>>, %arg5: memref<1x256xf32, #tpu.memory_space<vmem>>, %arg6: memref<256x256xbf16, #tpu.memory_space<vmem>>, %arg7: memref<1x256xf32, #tpu.memory_space<vmem>>, %arg8: memref<256x256xbf16, #tpu.memory_space<vmem>>, %arg9: memref<1x256xf32, #tpu.memory_space<vmem>>, %arg10: memref<256x6xbf16, #tpu.memory_space<vmem>>, %arg11: memref<1x6xf32, #tpu.memory_space<vmem>>, %arg12: memref<2x6xf32, #tpu.memory_space<vmem>>, %arg13: memref<2x256xf32, #tpu.memory_space<vmem>>) attributes {dimension_semantics = [#tpu.dimension_semantics<arbitrary>], iteration_bounds = array<i64: 3>, scalar_prefetch = 0 : i64, scratch_operands = 1 : i64, tpu.core_type = #tpu.core_type<tc>, window_params = [{transform_indices = @transform_0, window_bounds = array<i64: 2, 16, 768>}, {transform_indices = @transform_1, window_bounds = array<i64: 768, 256>}, {pipeline_mode = #tpu.pipeline_mode<synchronous>, transform_indices = @transform_2, window_bounds = array<i64: 1, 256>}, {pipeline_mode = #tpu.pipeline_mode<synchronous>, transform_indices = @transform_3, window_bounds = array<i64: 256, 256>}, {pipeline_mode = #tpu.pipeline_mode<synchronous>, transform_indices = @transform_4, window_bounds = array<i64: 1, 256>}, {pipeline_mode = #tpu.pipeline_mode<synchronous>, transform_indices = @transform_5, window_bounds = array<i64: 256, 256>}, {pipeline_mode = #tpu.pipeline_mode<synchronous>, transform_indices = @transform_6, window_bounds = array<i64: 1, 256>}, {pipeline_mode = #tpu.pipeline_mode<synchronous>, transform_indices = @transform_7, window_bounds = array<i64: 256, 256>}, {pipeline_mode = #tpu.pipeline_mode<synchronous>, transform_indices = @transform_8, window_bounds = array<i64: 1, 256>}, {pipeline_mode = #tpu.pipeline_mode<synchronous>, transform_indices = @transform_9, window_bounds = array<i64: 256, 6>}, {pipeline_mode = #tpu.pipeline_mode<synchronous>, transform_indices = @transform_10, window_bounds = array<i64: 1, 6>}, {pipeline_mode = #tpu.pipeline_mode<synchronous>, transform_indices = @transform_11, window_bounds = array<i64: 2, 6>}]} {
    %c0_i32 = arith.constant 0 : i32
    %0 = arith.cmpi eq, %arg0, %c0_i32 : i32
    %1 = arith.extui %0 : i1 to i32
    %c0_i32_0 = arith.constant 0 : i32
    %2 = arith.cmpi ne, %1, %c0_i32_0 : i32
    scf.if %2 {
      %cst_11 = arith.constant 0.000000e+00 : f32
      %13 = vector.broadcast %cst_11 : f32 to vector<2x256xf32>
      %c0_12 = arith.constant 0 : index
      %c0_13 = arith.constant 0 : index
      %14 = vector.load %arg13[%c0_12, %c0_13] : memref<2x256xf32, #tpu.memory_space<vmem>>, vector<2x256xf32>
      tpu.vector_store %arg13[%c0_12, %c0_13], %13 {strides = array<i32>} : memref<2x256xf32, #tpu.memory_space<vmem>>, vector<2x256xf32>,
    } else {
    }
    %c0 = arith.constant 0 : index
    %c0_1 = arith.constant 0 : index
    %c0_2 = arith.constant 0 : index
    %3 = vector.load %arg1[%c0, %c0_1, %c0_2] : memref<2x16x768xbf16, #tpu.memory_space<vmem>>, vector<2x16x768xbf16>
    %cst = arith.constant dense<0xFF80> : vector<2x768xbf16>
    %4 = vector.multi_reduction <maximumf>, %3, %cst [1] : vector<2x16x768xbf16> to vector<2x768xbf16>
    %c0_3 = arith.constant 0 : index
    %c0_4 = arith.constant 0 : index
    %5 = vector.load %arg13[%c0_3, %c0_4] : memref<2x256xf32, #tpu.memory_space<vmem>>, vector<2x256xf32>
    %c0_5 = arith.constant 0 : index
    %c0_6 = arith.constant 0 : index
    %6 = vector.load %arg2[%c0_5, %c0_6] : memref<768x256xbf16, #tpu.memory_space<vmem>>, vector<768x256xbf16>
    %cst_7 = arith.constant dense<0.000000e+00> : vector<2x256xf32>
    %7 = tpu.matmul %4, %6, %cst_7 {dimension_numbers = #tpu.dot_dimension_numbers<[1], [0], [0], [1], [0, 0, 1, 1], [], []>} : vector<2x768xbf16>, vector<768x256xbf16>, vector<2x256xf32> -> vector<2x256xf32>
    %8 = arith.addf %5, %7 : vector<2x256xf32>
    %c0_8 = arith.constant 0 : index
    %c0_9 = arith.constant 0 : index
    %9 = vector.load %arg13[%c0_8, %c0_9] : memref<2x256xf32, #tpu.memory_space<vmem>>, vector<2x256xf32>
    tpu.vector_store %arg13[%c0_8, %c0_9], %8 {strides = array<i32>} : memref<2x256xf32, #tpu.memory_space<vmem>>, vector<2x256xf32>,
    %c2_i32 = arith.constant 2 : i32
    %10 = arith.cmpi eq, %arg0, %c2_i32 : i32
    %11 = arith.extui %10 : i1 to i32
    %c0_i32_10 = arith.constant 0 : i32
    %12 = arith.cmpi ne, %11, %c0_i32_10 : i32
    scf.if %12 {
      %c0_11 = arith.constant 0 : index
      %c0_12 = arith.constant 0 : index
      %13 = vector.load %arg13[%c0_11, %c0_12] : memref<2x256xf32, #tpu.memory_space<vmem>>, vector<2x256xf32>
      %c0_13 = arith.constant 0 : index
      %c0_14 = arith.constant 0 : index
      %14 = vector.load %arg3[%c0_13, %c0_14] : memref<1x256xf32, #tpu.memory_space<vmem>>, vector<1x256xf32>
      %15 = vector.broadcast %14 : vector<1x256xf32> to vector<2x256xf32>
      %16 = arith.addf %13, %15 : vector<2x256xf32>
      %cst_15 = arith.constant 0.000000e+00 : f32
      %17 = vector.broadcast %cst_15 : f32 to vector<2x256xf32>
      %18 = arith.maximumf %16, %17 : vector<2x256xf32>
      %19 = arith.truncf %18 : vector<2x256xf32> to vector<2x256xbf16>
      %c0_16 = arith.constant 0 : index
      %c0_17 = arith.constant 0 : index
      %20 = vector.load %arg4[%c0_16, %c0_17] : memref<256x256xbf16, #tpu.memory_space<vmem>>, vector<256x256xbf16>
      %cst_18 = arith.constant dense<0.000000e+00> : vector<2x256xf32>
      %21 = tpu.matmul %19, %20, %cst_18 {dimension_numbers = #tpu.dot_dimension_numbers<[1], [0], [0], [1], [0, 0, 1, 1], [], []>} : vector<2x256xbf16>, vector<256x256xbf16>, vector<2x256xf32> -> vector<2x256xf32>
      %c0_19 = arith.constant 0 : index
      %c0_20 = arith.constant 0 : index
      %22 = vector.load %arg5[%c0_19, %c0_20] : memref<1x256xf32, #tpu.memory_space<vmem>>, vector<1x256xf32>
      %23 = vector.broadcast %22 : vector<1x256xf32> to vector<2x256xf32>
      %24 = arith.addf %21, %23 : vector<2x256xf32>
      %cst_21 = arith.constant 0.000000e+00 : f32
      %25 = vector.broadcast %cst_21 : f32 to vector<2x256xf32>
      %26 = arith.maximumf %24, %25 : vector<2x256xf32>
      %27 = arith.truncf %26 : vector<2x256xf32> to vector<2x256xbf16>
      %c0_22 = arith.constant 0 : index
      %c0_23 = arith.constant 0 : index
      %28 = vector.load %arg6[%c0_22, %c0_23] : memref<256x256xbf16, #tpu.memory_space<vmem>>, vector<256x256xbf16>
      %cst_24 = arith.constant dense<0.000000e+00> : vector<2x256xf32>
      %29 = tpu.matmul %27, %28, %cst_24 {dimension_numbers = #tpu.dot_dimension_numbers<[1], [0], [0], [1], [0, 0, 1, 1], [], []>} : vector<2x256xbf16>, vector<256x256xbf16>, vector<2x256xf32> -> vector<2x256xf32>
      %c0_25 = arith.constant 0 : index
      %c0_26 = arith.constant 0 : index
      %30 = vector.load %arg7[%c0_25, %c0_26] : memref<1x256xf32, #tpu.memory_space<vmem>>, vector<1x256xf32>
      %31 = vector.broadcast %30 : vector<1x256xf32> to vector<2x256xf32>
      %32 = arith.addf %29, %31 : vector<2x256xf32>
      %cst_27 = arith.constant 0.000000e+00 : f32
      %33 = vector.broadcast %cst_27 : f32 to vector<2x256xf32>
      %34 = arith.maximumf %32, %33 : vector<2x256xf32>
      %35 = arith.truncf %34 : vector<2x256xf32> to vector<2x256xbf16>
      %c0_28 = arith.constant 0 : index
      %c0_29 = arith.constant 0 : index
      %36 = vector.load %arg8[%c0_28, %c0_29] : memref<256x256xbf16, #tpu.memory_space<vmem>>, vector<256x256xbf16>
      %cst_30 = arith.constant dense<0.000000e+00> : vector<2x256xf32>
      %37 = tpu.matmul %35, %36, %cst_30 {dimension_numbers = #tpu.dot_dimension_numbers<[1], [0], [0], [1], [0, 0, 1, 1], [], []>} : vector<2x256xbf16>, vector<256x256xbf16>, vector<2x256xf32> -> vector<2x256xf32>
      %c0_31 = arith.constant 0 : index
      %c0_32 = arith.constant 0 : index
      %38 = vector.load %arg9[%c0_31, %c0_32] : memref<1x256xf32, #tpu.memory_space<vmem>>, vector<1x256xf32>
      %39 = vector.broadcast %38 : vector<1x256xf32> to vector<2x256xf32>
      %40 = arith.addf %37, %39 : vector<2x256xf32>
      %cst_33 = arith.constant 0.000000e+00 : f32
      %41 = vector.broadcast %cst_33 : f32 to vector<2x256xf32>
      %42 = arith.maximumf %40, %41 : vector<2x256xf32>
      %43 = arith.truncf %42 : vector<2x256xf32> to vector<2x256xbf16>
      %c0_34 = arith.constant 0 : index
      %c0_35 = arith.constant 0 : index
      %44 = vector.load %arg10[%c0_34, %c0_35] : memref<256x6xbf16, #tpu.memory_space<vmem>>, vector<256x6xbf16>
      %cst_36 = arith.constant dense<0.000000e+00> : vector<2x6xf32>
      %45 = tpu.matmul %43, %44, %cst_36 {dimension_numbers = #tpu.dot_dimension_numbers<[1], [0], [0], [1], [0, 0, 1, 1], [], []>} : vector<2x256xbf16>, vector<256x6xbf16>, vector<2x6xf32> -> vector<2x6xf32>
      %c0_37 = arith.constant 0 : index
      %c0_38 = arith.constant 0 : index
      %46 = vector.load %arg11[%c0_37, %c0_38] : memref<1x6xf32, #tpu.memory_space<vmem>>, vector<1x6xf32>
      %47 = vector.broadcast %46 : vector<1x6xf32> to vector<2x6xf32>
      %48 = arith.addf %45, %47 : vector<2x6xf32>
      %c0_39 = arith.constant 0 : index
      %c0_40 = arith.constant 0 : index
      %49 = vector.load %arg12[%c0_39, %c0_40] : memref<2x6xf32, #tpu.memory_space<vmem>>, vector<2x6xf32>
      tpu.vector_store %arg12[%c0_39, %c0_40], %48 {strides = array<i32>} : memref<2x6xf32, #tpu.memory_space<vmem>>, vector<2x6xf32>,
    } else {
    }
    return
  }
  func.func @transform_0(%arg0: i32) -> (i32, i32, i32) {
    %c0_i32 = arith.constant 0 : i32
    %c0_i32_0 = arith.constant 0 : i32
    %c0_i32_1 = arith.constant 0 : i32
    return %c0_i32, %c0_i32_0, %arg0 : i32, i32, i32
  }
  func.func @transform_1(%arg0: i32) -> (i32, i32) {
    %c0_i32 = arith.constant 0 : i32
    %c0_i32_0 = arith.constant 0 : i32
    return %arg0, %c0_i32 : i32, i32
  }
  func.func @transform_2(%arg0: i32) -> (i32, i32) {
    %c0_i32 = arith.constant 0 : i32
    %c0_i32_0 = arith.constant 0 : i32
    %c0_i32_1 = arith.constant 0 : i32
    return %c0_i32, %c0_i32_0 : i32, i32
  }
  func.func @transform_3(%arg0: i32) -> (i32, i32) {
    %c0_i32 = arith.constant 0 : i32
    %c0_i32_0 = arith.constant 0 : i32
    %c0_i32_1 = arith.constant 0 : i32
    return %c0_i32, %c0_i32_0 : i32, i32
  }
  func.func @transform_4(%arg0: i32) -> (i32, i32) {
    %c0_i32 = arith.constant 0 : i32
    %c0_i32_0 = arith.constant 0 : i32
    %c0_i32_1 = arith.constant 0 : i32
    return %c0_i32, %c0_i32_0 : i32, i32
  }
  func.func @transform_5(%arg0: i32) -> (i32, i32) {
    %c0_i32 = arith.constant 0 : i32
    %c0_i32_0 = arith.constant 0 : i32
    %c0_i32_1 = arith.constant 0 : i32
    return %c0_i32, %c0_i32_0 : i32, i32
  }
  func.func @transform_6(%arg0: i32) -> (i32, i32) {
    %c0_i32 = arith.constant 0 : i32
    %c0_i32_0 = arith.constant 0 : i32
    %c0_i32_1 = arith.constant 0 : i32
    return %c0_i32, %c0_i32_0 : i32, i32
  }
  func.func @transform_7(%arg0: i32) -> (i32, i32) {
    %c0_i32 = arith.constant 0 : i32
    %c0_i32_0 = arith.constant 0 : i32
    %c0_i32_1 = arith.constant 0 : i32
    return %c0_i32, %c0_i32_0 : i32, i32
  }
  func.func @transform_8(%arg0: i32) -> (i32, i32) {
    %c0_i32 = arith.constant 0 : i32
    %c0_i32_0 = arith.constant 0 : i32
    %c0_i32_1 = arith.constant 0 : i32
    return %c0_i32, %c0_i32_0 : i32, i32
  }
  func.func @transform_9(%arg0: i32) -> (i32, i32) {
    %c0_i32 = arith.constant 0 : i32
    %c0_i32_0 = arith.constant 0 : i32
    %c0_i32_1 = arith.constant 0 : i32
    return %c0_i32, %c0_i32_0 : i32, i32
  }
  func.func @transform_10(%arg0: i32) -> (i32, i32) {
    %c0_i32 = arith.constant 0 : i32
    %c0_i32_0 = arith.constant 0 : i32
    %c0_i32_1 = arith.constant 0 : i32
    return %c0_i32, %c0_i32_0 : i32, i32
  }
  func.func @transform_11(%arg0: i32) -> (i32, i32) {
    %c0_i32 = arith.constant 0 : i32
    %c0_i32_0 = arith.constant 0 : i32
    %c0_i32_1 = arith.constant 0 : i32
    return %c0_i32, %c0_i32_0 : i32, i32
  }
}

</mosaic_0001>

<llo_original>
// kernel: neural_network_forward.2
$region0: #{neural_network_forward.2}
  #allocation0 [shape = 'u32[]', space=smem, size = 0x4, offset = 0x4, fixed_abs, tag = 'smem constant byte address 0x4 - core index']
  #allocation1 [shape = 'u32[144,128]{1,0:T(1,128)}', space=vmem, size = 0x12000, scoped, tag = 'internal scratch']
  #allocation2 [shape = 'f32[2,256]{1,0:T(2,128)}', space=vmem, size = 0x800, scoped, tag = 'scratch operand']
  #allocation3 [shape = 'u32[2048]{0}', space=vmem, size = 0x2000, scoped, tag = 'scoped memory for neural_network_forward.2']
  #allocation4 [shape = 'u32[2048]{0}', space=vmem, size = 0x2000, scoped, tag = 'scoped memory for neural_network_forward.2']
  #allocation5 [shape = 'u32[2048]{0}', space=vmem, size = 0x2000, scoped, tag = 'scoped memory for neural_network_forward.2']
  #allocation6 [shape = 'u32[2048]{0}', space=vmem, size = 0x2000, scoped, tag = 'scoped memory for neural_network_forward.2']
  #allocation7 [shape = 'u32[2048]{0}', space=vmem, size = 0x2000, scoped, tag = 'scoped memory for neural_network_forward.2']
  %s0 = inlined_call_operand.vmem [shape: bf16[2304,256], index: 0, kind: input, shape index: {}]
  %s1 = inlined_call_operand.vmem [shape: f32[1,256], index: 1, kind: input, shape index: {}]
  %s2 = inlined_call_operand.vmem [shape: bf16[256,256], index: 2, kind: input, shape index: {}]
  %s3 = inlined_call_operand.vmem [shape: f32[1,256], index: 3, kind: input, shape index: {}]
  %s4 = inlined_call_operand.vmem [shape: bf16[256,256], index: 4, kind: input, shape index: {}]
  %s5 = inlined_call_operand.vmem [shape: f32[1,256], index: 5, kind: input, shape index: {}]
  %s6 = inlined_call_operand.vmem [shape: bf16[256,256], index: 6, kind: input, shape index: {}]
  %s7 = inlined_call_operand.vmem [shape: f32[1,256], index: 7, kind: input, shape index: {}]
  %s8 = inlined_call_operand.vmem [shape: bf16[256,6], index: 8, kind: input, shape index: {}]
  %s9 = inlined_call_operand.vmem [shape: f32[1,6], index: 9, kind: input, shape index: {}]
  %s10 = inlined_call_operand.vmem [shape: bf16[2,16,2080], index: 10, kind: input, shape index: {}]
  %s11 = inlined_call_operand.<no memory space> [shape: bf16[], index: 11, kind: input, shape index: {}]
  %s12 = inlined_call_operand.hbm [shape: f32[2,6], index: 12, kind: output, shape index: {}]
  %s13 = sld [smem:[#allocation0]]
  $region85: #{neural_network_forward.2} parent=0
    _
  %s15 = ssub.s32 1, %s13
  %s16 = scalar_select 0, %s15, %s13
  %v17 = vstv %s11
  %v18 = vunpack.i.l.bf16 %v17
  %v20 = vunpack.i.h.bf16 %v17
  $region1: #{neural_network_forward.2} parent=0
    #allocation8 [shape = 'u8[1024]{0}', space=vmem, size = 0x400, scoped, tag = 'output window, operand 0, single buffered']
    #allocation9 [shape = 's32[2]{0}', space=sflag, size = 0x8, scoped, tag = 'scoped memory for neural_network_forward.2']
    %22 = vsyncpa [#allocation9], 0
    loop: start=0, step=1, limit=5
    $region2: #{neural_network_forward.2} parent=1 // loop_pre_header
      _
    $region3: #{neural_network_forward.2} parent=1 // loop_header
      %s24 = sphi 0, %s28
      %p25 = scmp.ge.s32.totalorder %s24, 5
      %s34 = sphi 0, %s36
      %s37 = sphi 0, %s34
      %s38 = sphi 0, %s37
      %s54 = sphi 0, %s38
      %s60 = sphi 0, %s62
      %s63 = sphi 0, %s60
      %s64 = sphi 0, %s63
      %s80 = sphi 0, %s64
      %s84 = sphi 0, %s84
      %s86 = sphi 0, %s84
      %s87 = sphi 0, %s86
      %s101 = sphi 0, %s87
      %s105 = sphi 0, %s105
      %s107 = sphi 0, %s105
      %s108 = sphi 0, %s107
      %s122 = sphi 0, %s108
      %s126 = sphi 0, %s126
      %s128 = sphi 0, %s126
      %s129 = sphi 0, %s128
      %s143 = sphi 0, %s129
      %s147 = sphi 0, %s147
      %s149 = sphi 0, %s147
      %s150 = sphi 0, %s149
      %s164 = sphi 0, %s150
      %s168 = sphi 0, %s168
      %s170 = sphi 0, %s168
      %s171 = sphi 0, %s170
      %s185 = sphi 0, %s171
      %s189 = sphi 0, %s189
      %s191 = sphi 0, %s189
      %s192 = sphi 0, %s191
      %s206 = sphi 0, %s192
      %s210 = sphi 0, %s210
      %s212 = sphi 0, %s210
      %s213 = sphi 0, %s212
      %s227 = sphi 0, %s213
      %s231 = sphi 0, %s231
      %s233 = sphi 0, %s231
      %s234 = sphi 0, %s233
      %s248 = sphi 0, %s234
      %s252 = sphi 0, %s252
      %s254 = sphi 0, %s252
      %s255 = sphi 0, %s254
      %s269 = sphi 0, %s255
      %s273 = sphi 0, %s273
      %s275 = sphi 0, %s273
      %s276 = sphi 0, %s275
      %s290 = sphi 0, %s276
    $region4: #{neural_network_forward.2} parent=1 // loop_header_branch
      %27 = sbr.rel (%p25) target = $region8
    $region5: #{neural_network_forward.2} parent=1 // loop_body
      %s29 = ssub.s32 %s24, 1
      %s30 = ssub.s32 %s24, 2
      %s31 = sadd.s32 %s24, 1
      %s32 = ssub.s32 %s24, %s31
      %p33 = scmp.eq.s32.totalorder %s32, 0
      %s35 = sadd.s32 %s34, 1
      %s36 = scalar_select %p33, %s34, %s35
      %p39 = pneg %p33
      %p40 = scmp.eq.s32.totalorder %s24, 2
      %p41 = por %p39, %p40
      %p42 = scmp.ne.s32.totalorder %s34, %s37
      %p43 = scmp.eq.s32.totalorder %s24, 0
      %p44 = por %p42, %p43
      %p45 = scmp.ne.s32.totalorder %s34, %s37
      %p46 = scmp.eq.s32.totalorder %s29, 2
      %p47 = por %p45, %p46
      %p48 = scmp.ne.s32.totalorder %s37, %s38
      %p49 = scmp.eq.s32.totalorder %s29, 0
      %p50 = por %p48, %p49
      %p51 = scmp.ne.s32.totalorder %s37, %s38
      %p52 = scmp.eq.s32.totalorder %s30, 2
      %p53 = por %p51, %p52
      %p55 = scmp.ne.s32.totalorder %s38, %s54
      %p56 = scmp.eq.s32.totalorder %s30, 0
      %p57 = por %p55, %p56
      %s58 = ssub.s32 %s24, %s31
      %p59 = scmp.eq.s32.totalorder %s58, 0
      %s61 = sadd.s32 %s60, 1
      %s62 = scalar_select %p59, %s60, %s61
      %p65 = pneg %p59
      %p66 = scmp.eq.s32.totalorder %s24, 2
      %p67 = por %p65, %p66
      %p68 = scmp.ne.s32.totalorder %s60, %s63
      %p69 = scmp.eq.s32.totalorder %s24, 0
      %p70 = por %p68, %p69
      %p71 = scmp.ne.s32.totalorder %s60, %s63
      %p72 = scmp.eq.s32.totalorder %s29, 2
      %p73 = por %p71, %p72
      %p74 = scmp.ne.s32.totalorder %s63, %s64
      %p75 = scmp.eq.s32.totalorder %s29, 0
      %p76 = por %p74, %p75
      %p77 = scmp.ne.s32.totalorder %s63, %s64
      %p78 = scmp.eq.s32.totalorder %s30, 2
      %p79 = por %p77, %p78
      %p81 = scmp.ne.s32.totalorder %s64, %s80
      %p82 = scmp.eq.s32.totalorder %s30, 0
      %p83 = por %p81, %p82
      %s85 = sadd.s32 %s84, 1
      %p88 = scmp.eq.s32.totalorder %s24, 2
      %p89 = scmp.ne.s32.totalorder %s84, %s86
      %p90 = scmp.eq.s32.totalorder %s24, 0
      %p91 = por %p89, %p90
      %p92 = scmp.ne.s32.totalorder %s84, %s86
      %p93 = scmp.eq.s32.totalorder %s29, 2
      %p94 = por %p92, %p93
      %p95 = scmp.ne.s32.totalorder %s86, %s87
      %p96 = scmp.eq.s32.totalorder %s29, 0
      %p97 = por %p95, %p96
      %p98 = scmp.ne.s32.totalorder %s86, %s87
      %p99 = scmp.eq.s32.totalorder %s30, 2
      %p100 = por %p98, %p99
      %p102 = scmp.ne.s32.totalorder %s87, %s101
      %p103 = scmp.eq.s32.totalorder %s30, 0
      %p104 = por %p102, %p103
      %s106 = sadd.s32 %s105, 1
      %p109 = scmp.eq.s32.totalorder %s24, 2
      %p110 = scmp.ne.s32.totalorder %s105, %s107
      %p111 = scmp.eq.s32.totalorder %s24, 0
      %p112 = por %p110, %p111
      %p113 = scmp.ne.s32.totalorder %s105, %s107
      %p114 = scmp.eq.s32.totalorder %s29, 2
      %p115 = por %p113, %p114
      %p116 = scmp.ne.s32.totalorder %s107, %s108
      %p117 = scmp.eq.s32.totalorder %s29, 0
      %p118 = por %p116, %p117
      %p119 = scmp.ne.s32.totalorder %s107, %s108
      %p120 = scmp.eq.s32.totalorder %s30, 2
      %p121 = por %p119, %p120
      %p123 = scmp.ne.s32.totalorder %s108, %s122
      %p124 = scmp.eq.s32.totalorder %s30, 0
      %p125 = por %p123, %p124
      %s127 = sadd.s32 %s126, 1
      %p130 = scmp.eq.s32.totalorder %s24, 2
      %p131 = scmp.ne.s32.totalorder %s126, %s128
      %p132 = scmp.eq.s32.totalorder %s24, 0
      %p133 = por %p131, %p132
      %p134 = scmp.ne.s32.totalorder %s126, %s128
      %p135 = scmp.eq.s32.totalorder %s29, 2
      %p136 = por %p134, %p135
      %p137 = scmp.ne.s32.totalorder %s128, %s129
      %p138 = scmp.eq.s32.totalorder %s29, 0
      %p139 = por %p137, %p138
      %p140 = scmp.ne.s32.totalorder %s128, %s129
      %p141 = scmp.eq.s32.totalorder %s30, 2
      %p142 = por %p140, %p141
      %p144 = scmp.ne.s32.totalorder %s129, %s143
      %p145 = scmp.eq.s32.totalorder %s30, 0
      %p146 = por %p144, %p145
      %s148 = sadd.s32 %s147, 1
      %p151 = scmp.eq.s32.totalorder %s24, 2
      %p152 = scmp.ne.s32.totalorder %s147, %s149
      %p153 = scmp.eq.s32.totalorder %s24, 0
      %p154 = por %p152, %p153
      %p155 = scmp.ne.s32.totalorder %s147, %s149
      %p156 = scmp.eq.s32.totalorder %s29, 2
      %p157 = por %p155, %p156
      %p158 = scmp.ne.s32.totalorder %s149, %s150
      %p159 = scmp.eq.s32.totalorder %s29, 0
      %p160 = por %p158, %p159
      %p161 = scmp.ne.s32.totalorder %s149, %s150
      %p162 = scmp.eq.s32.totalorder %s30, 2
      %p163 = por %p161, %p162
      %p165 = scmp.ne.s32.totalorder %s150, %s164
      %p166 = scmp.eq.s32.totalorder %s30, 0
      %p167 = por %p165, %p166
      %s169 = sadd.s32 %s168, 1
      %p172 = scmp.eq.s32.totalorder %s24, 2
      %p173 = scmp.ne.s32.totalorder %s168, %s170
      %p174 = scmp.eq.s32.totalorder %s24, 0
      %p175 = por %p173, %p174
      %p176 = scmp.ne.s32.totalorder %s168, %s170
      %p177 = scmp.eq.s32.totalorder %s29, 2
      %p178 = por %p176, %p177
      %p179 = scmp.ne.s32.totalorder %s170, %s171
      %p180 = scmp.eq.s32.totalorder %s29, 0
      %p181 = por %p179, %p180
      %p182 = scmp.ne.s32.totalorder %s170, %s171
      %p183 = scmp.eq.s32.totalorder %s30, 2
      %p184 = por %p182, %p183
      %p186 = scmp.ne.s32.totalorder %s171, %s185
      %p187 = scmp.eq.s32.totalorder %s30, 0
      %p188 = por %p186, %p187
      %s190 = sadd.s32 %s189, 1
      %p193 = scmp.eq.s32.totalorder %s24, 2
      %p194 = scmp.ne.s32.totalorder %s189, %s191
      %p195 = scmp.eq.s32.totalorder %s24, 0
      %p196 = por %p194, %p195
      %p197 = scmp.ne.s32.totalorder %s189, %s191
      %p198 = scmp.eq.s32.totalorder %s29, 2
      %p199 = por %p197, %p198
      %p200 = scmp.ne.s32.totalorder %s191, %s192
      %p201 = scmp.eq.s32.totalorder %s29, 0
      %p202 = por %p200, %p201
      %p203 = scmp.ne.s32.totalorder %s191, %s192
      %p204 = scmp.eq.s32.totalorder %s30, 2
      %p205 = por %p203, %p204
      %p207 = scmp.ne.s32.totalorder %s192, %s206
      %p208 = scmp.eq.s32.totalorder %s30, 0
      %p209 = por %p207, %p208
      %s211 = sadd.s32 %s210, 1
      %p214 = scmp.eq.s32.totalorder %s24, 2
      %p215 = scmp.ne.s32.totalorder %s210, %s212
      %p216 = scmp.eq.s32.totalorder %s24, 0
      %p217 = por %p215, %p216
      %p218 = scmp.ne.s32.totalorder %s210, %s212
      %p219 = scmp.eq.s32.totalorder %s29, 2
      %p220 = por %p218, %p219
      %p221 = scmp.ne.s32.totalorder %s212, %s213
      %p222 = scmp.eq.s32.totalorder %s29, 0
      %p223 = por %p221, %p222
      %p224 = scmp.ne.s32.totalorder %s212, %s213
      %p225 = scmp.eq.s32.totalorder %s30, 2
      %p226 = por %p224, %p225
      %p228 = scmp.ne.s32.totalorder %s213, %s227
      %p229 = scmp.eq.s32.totalorder %s30, 0
      %p230 = por %p228, %p229
      %s232 = sadd.s32 %s231, 1
      %p235 = scmp.eq.s32.totalorder %s24, 2
      %p236 = scmp.ne.s32.totalorder %s231, %s233
      %p237 = scmp.eq.s32.totalorder %s24, 0
      %p238 = por %p236, %p237
      %p239 = scmp.ne.s32.totalorder %s231, %s233
      %p240 = scmp.eq.s32.totalorder %s29, 2
      %p241 = por %p239, %p240
      %p242 = scmp.ne.s32.totalorder %s233, %s234
      %p243 = scmp.eq.s32.totalorder %s29, 0
      %p244 = por %p242, %p243
      %p245 = scmp.ne.s32.totalorder %s233, %s234
      %p246 = scmp.eq.s32.totalorder %s30, 2
      %p247 = por %p245, %p246
      %p249 = scmp.ne.s32.totalorder %s234, %s248
      %p250 = scmp.eq.s32.totalorder %s30, 0
      %p251 = por %p249, %p250
      %s253 = sadd.s32 %s252, 1
      %p256 = scmp.eq.s32.totalorder %s24, 2
      %p257 = scmp.ne.s32.totalorder %s252, %s254
      %p258 = scmp.eq.s32.totalorder %s24, 0
      %p259 = por %p257, %p258
      %p260 = scmp.ne.s32.totalorder %s252, %s254
      %p261 = scmp.eq.s32.totalorder %s29, 2
      %p262 = por %p260, %p261
      %p263 = scmp.ne.s32.totalorder %s254, %s255
      %p264 = scmp.eq.s32.totalorder %s29, 0
      %p265 = por %p263, %p264
      %p266 = scmp.ne.s32.totalorder %s254, %s255
      %p267 = scmp.eq.s32.totalorder %s30, 2
      %p268 = por %p266, %p267
      %p270 = scmp.ne.s32.totalorder %s255, %s269
      %p271 = scmp.eq.s32.totalorder %s30, 0
      %p272 = por %p270, %p271
      %s274 = sadd.s32 %s273, 1
      %p277 = scmp.eq.s32.totalorder %s24, 2
      %p278 = scmp.ne.s32.totalorder %s273, %s275
      %p279 = scmp.eq.s32.totalorder %s24, 0
      %p280 = por %p278, %p279
      %p281 = scmp.ne.s32.totalorder %s273, %s275
      %p282 = scmp.eq.s32.totalorder %s29, 2
      %p283 = por %p281, %p282
      %p284 = scmp.ne.s32.totalorder %s275, %s276
      %p285 = scmp.eq.s32.totalorder %s29, 0
      %p286 = por %p284, %p285
      %p287 = scmp.ne.s32.totalorder %s275, %s276
      %p288 = scmp.eq.s32.totalorder %s30, 2
      %p289 = por %p287, %p288
      %p291 = scmp.ne.s32.totalorder %s276, %s290
      %p292 = scmp.eq.s32.totalorder %s30, 0
      %p293 = por %p291, %p292
      %p294 = scmp.le.s32.totalorder 1, %s24
      %p295 = scmp.lt.s32.totalorder %s24, 4
      %p296 = pnand %p294, %p295
      %p297 = pneg %p296
      // Predicated region
      $region9: #{neural_network_forward.2} parent=5 // pred_check
        _
      $region10: #{neural_network_forward.2} parent=5 // pred_check_branch
        %299 = sbr.rel (%p296) target = $region12
      $region11: #{neural_network_forward.2} parent=5 // pred_region
        %s300 = ssub.s32 %s24, 1
        // Predicated region
        $region13: #{neural_network_forward.2} parent=11 // pred_check
          %p301 = pneg %p97
        $region14: #{neural_network_forward.2} parent=11 // pred_check_branch
          %303 = sbr.rel (%p301) target = $region16
        $region15: #{neural_network_forward.2} parent=11 // pred_region
          _
        $region16: #{neural_network_forward.2} parent=11 // pred_fallthru
          _
        // Predicated region
        $region17: #{neural_network_forward.2} parent=11 // pred_check
          %p304 = pneg %p118
        $region18: #{neural_network_forward.2} parent=11 // pred_check_branch
          %306 = sbr.rel (%p304) target = $region20
        $region19: #{neural_network_forward.2} parent=11 // pred_region
          _
        $region20: #{neural_network_forward.2} parent=11 // pred_fallthru
          _
        // Predicated region
        $region21: #{neural_network_forward.2} parent=11 // pred_check
          %p307 = pneg %p139
        $region22: #{neural_network_forward.2} parent=11 // pred_check_branch
          %309 = sbr.rel (%p307) target = $region24
        $region23: #{neural_network_forward.2} parent=11 // pred_region
          _
        $region24: #{neural_network_forward.2} parent=11 // pred_fallthru
          _
        // Predicated region
        $region25: #{neural_network_forward.2} parent=11 // pred_check
          %p310 = pneg %p160
        $region26: #{neural_network_forward.2} parent=11 // pred_check_branch
          %312 = sbr.rel (%p310) target = $region28
        $region27: #{neural_network_forward.2} parent=11 // pred_region
          _
        $region28: #{neural_network_forward.2} parent=11 // pred_fallthru
          _
        // Predicated region
        $region29: #{neural_network_forward.2} parent=11 // pred_check
          %p313 = pneg %p181
        $region30: #{neural_network_forward.2} parent=11 // pred_check_branch
          %315 = sbr.rel (%p313) target = $region32
        $region31: #{neural_network_forward.2} parent=11 // pred_region
          _
        $region32: #{neural_network_forward.2} parent=11 // pred_fallthru
          _
        // Predicated region
        $region33: #{neural_network_forward.2} parent=11 // pred_check
          %p316 = pneg %p202
        $region34: #{neural_network_forward.2} parent=11 // pred_check_branch
          %318 = sbr.rel (%p316) target = $region36
        $region35: #{neural_network_forward.2} parent=11 // pred_region
          _
        $region36: #{neural_network_forward.2} parent=11 // pred_fallthru
          _
        // Predicated region
        $region37: #{neural_network_forward.2} parent=11 // pred_check
          %p319 = pneg %p223
        $region38: #{neural_network_forward.2} parent=11 // pred_check_branch
          %321 = sbr.rel (%p319) target = $region40
        $region39: #{neural_network_forward.2} parent=11 // pred_region
          _
        $region40: #{neural_network_forward.2} parent=11 // pred_fallthru
          _
        // Predicated region
        $region41: #{neural_network_forward.2} parent=11 // pred_check
          %p322 = pneg %p244
        $region42: #{neural_network_forward.2} parent=11 // pred_check_branch
          %324 = sbr.rel (%p322) target = $region44
        $region43: #{neural_network_forward.2} parent=11 // pred_region
          _
        $region44: #{neural_network_forward.2} parent=11 // pred_fallthru
          _
        // Predicated region
        $region45: #{neural_network_forward.2} parent=11 // pred_check
          %p325 = pneg %p265
        $region46: #{neural_network_forward.2} parent=11 // pred_check_branch
          %327 = sbr.rel (%p325) target = $region48
        $region47: #{neural_network_forward.2} parent=11 // pred_region
          _
        $region48: #{neural_network_forward.2} parent=11 // pred_fallthru
          _
      $region12: #{neural_network_forward.2} parent=5 // pred_fallthru
        _
      %p328 = scmp.lt.s32.totalorder %s24, 3
      // Predicated region
      $region49: #{neural_network_forward.2} parent=5 // pred_check
        %p329 = pneg %p328
      $region50: #{neural_network_forward.2} parent=5 // pred_check_branch
        %331 = sbr.rel (%p329) target = $region52
      $region51: #{neural_network_forward.2} parent=5 // pred_region
        // Predicated region
        $region53: #{neural_network_forward.2} parent=51 // pred_check
          %p332 = pneg %p44
        $region54: #{neural_network_forward.2} parent=51 // pred_check_branch
          %334 = sbr.rel (%p332) target = $region56
        $region55: #{neural_network_forward.2} parent=51 // pred_region
          %s335 = smul.u32 6, %s24
          %s336 = ssub.s32 17, %s335
          %p337 = scmp.lt.s32.totalorder %s336, 6
          %s338 = scalar_select %p337, %s336, 6
          %s339 = smul.u32 256, %s338
          %p340 = scmp.lt.s32.totalorder %s335, 16
          %s341 = scalar_select %p340, %s335, 16
          %s342 = smul.addr %s341, 4
          %s343 = scalar_lea.vmem %s10, %s342
          %s344 = smul.u32 6, %s24
          %s345 = ssub.s32 17, %s344
          %p346 = scmp.lt.s32.totalorder %s345, 6
          %s347 = scalar_select %p346, %s345, 6
          %s348 = smul.u32 256, %s347
        $region56: #{neural_network_forward.2} parent=51 // pred_fallthru
          _
        // Predicated region
        $region57: #{neural_network_forward.2} parent=51 // pred_check
          %p349 = pneg %p70
        $region58: #{neural_network_forward.2} parent=51 // pred_check_branch
          %351 = sbr.rel (%p349) target = $region60
        $region59: #{neural_network_forward.2} parent=51 // pred_region
          %s352 = smul.u32 96, %s24
          %p353 = scmp.lt.s32.totalorder %s352, 287
          %s354 = scalar_select %p353, %s352, 287
          %s355 = smul.addr %s354, 2
          %s356 = smul.addr %s355, 4
          %s357 = scalar_lea.vmem %s0, %s356
          %s358 = smul.u32 96, %s24
        $region60: #{neural_network_forward.2} parent=51 // pred_fallthru
          _
      $region52: #{neural_network_forward.2} parent=5 // pred_fallthru
        _
      %p359 = scmp.le.s32.totalorder 1, %s24
      %p360 = scmp.lt.s32.totalorder %s24, 4
      %p361 = pnand %p359, %p360
      %p362 = pneg %p361
      // Predicated region
      $region61: #{neural_network_forward.2} parent=5 // pred_check
        _
      $region62: #{neural_network_forward.2} parent=5 // pred_check_branch
        %364 = sbr.rel (%p361) target = $region64
      $region63: #{neural_network_forward.2} parent=5 // pred_region
        #allocation10 [shape = 'u8[49152]{0}', space=vmem, size = 0xc000, dematerialized = true, scoped, tag = 'FusionAdapter Buffer %fusion.1 = bf16[2,16,2304]{2,1,0:T(8,128)(2,1)} fusion(%param_10.1, %param_11), kind=kLoop, calls=%fused_computation.2.clone, metadata={op_name="jit(neural_network_forward)/jit(_pad)/pad" stack_frame_id=11}']
        %s365 = ssub.s32 %s24, 1
        %s366 = smul.u32 6, %s29
        %s367 = ssub.s32 17, %s366
        %p368 = scmp.lt.s32.totalorder %s367, 6
        %s369 = scalar_select %p368, %s367, 6
        %s370 = smul.u32 256, %s369
        %p371 = scmp.lt.s32.totalorder %s366, 16
        %s372 = scalar_select %p371, %s366, 16
        %s373 = smul.addr %s372, 4
        %s374 = scalar_lea.vmem %s10, %s373
        %p375 = pneg %p50
        %p376 = pneg %p47
        %s377 = smul.u32 96, %s29
        %p378 = scmp.lt.s32.totalorder %s377, 287
        %s379 = scalar_select %p378, %s377, 287
        %s380 = smul.addr %s379, 2
        %s381 = smul.addr %s380, 4
        %s382 = scalar_lea.vmem %s0, %s381
        %p383 = pneg %p76
        %p384 = pneg %p73
        %p385 = pneg %p97
        %p386 = pneg %p94
        %p387 = pneg %p118
        %p388 = pneg %p115
        %p389 = pneg %p139
        %p390 = pneg %p136
        %p391 = pneg %p160
        %p392 = pneg %p157
        %p393 = pneg %p181
        %p394 = pneg %p178
        %p395 = pneg %p202
        %p396 = pneg %p199
        %p397 = pneg %p223
        %p398 = pneg %p220
        %p399 = pneg %p244
        %p400 = pneg %p241
        %p401 = pneg %p265
        %p402 = pneg %p262
        %p403 = pneg %p286
        %p404 = pneg %p283
        %s405 = smul.u32 6, %s29
        %s406 = ssub.s32 17, %s405
        %p407 = scmp.lt.s32.totalorder %s406, 6
        %s408 = scalar_select %p407, %s406, 6
        %s409 = smul.u32 256, %s408
        %p410 = scmp.lt.s32.totalorder %s405, 16
        %s411 = scalar_select %p410, %s405, 16
        %s412 = smul.addr %s411, 4
        %s413 = scalar_lea.vmem %s10, %s412
        %s414 = smul.u32 6, %s29
        %s415 = ssub.s32 17, %s414
        %p416 = scmp.lt.s32.totalorder %s415, 6
        %s417 = scalar_select %p416, %s415, 6
        %s418 = smul.u32 256, %s417
        %s419 = smul.u32 96, %s29
        %p420 = scmp.lt.s32.totalorder %s419, 287
        %s421 = scalar_select %p420, %s419, 287
        %s422 = smul.addr %s421, 2
        %s423 = smul.addr %s422, 4
        %s424 = scalar_lea.vmem %s0, %s423
        %s425 = smul.u32 96, %s29
        %v426 = vld [vmem:[%s413] sm:$0xf]
        %v427 = vunpack.c.l.bf16 %v426
        %v428 = vunpack.c.h.bf16 %v426
        %s429 = smul.addr %s414, 128
        %v430 = vlaneseq
        %v431 = vand.u32 %v430, 127
        %v432 = vstv %s429
        %v433 = vadd.s32 %v431, %v432
        %vm434 = vcmp.lt.s32.totalorder %v433, 2080
        %v435 = vsel %vm434, %v427, %v18
        %v436 = vpack.c.bf16 0.0, %v435
        %s438 = ssub.s32 16, 1
        %439 = vst [vmem:[#allocation10] sm:%s438] %v436
        %s440 = scalar_lea.vmem %s413, 4
        %v441 = vld [vmem:[%s440] sm:$0xf]
        %v442 = vunpack.c.l.bf16 %v441
        %v443 = vunpack.c.h.bf16 %v441
        %s444 = sadd.s32 %s414, 1
        %s445 = smul.addr %s444, 128
        %v446 = vlaneseq
        %v447 = vand.u32 %v446, 127
        %v448 = vstv %s445
        %v449 = vadd.s32 %v447, %v448
        %vm450 = vcmp.lt.s32.totalorder %v449, 2080
        %v451 = vsel %vm450, %v442, %v18
        %s452 = scalar_lea.vmem [#allocation10], 4
        %v453 = vpack.c.bf16 0.0, %v451
        %s455 = ssub.s32 16, 1
        %456 = vst [vmem:[%s452] sm:%s455] %v453
        %s457 = scalar_lea.vmem %s413, 8
        %v458 = vld [vmem:[%s457] sm:$0xf]
        %v459 = vunpack.c.l.bf16 %v458
        %v460 = vunpack.c.h.bf16 %v458
        %s461 = sadd.s32 %s414, 2
        %s462 = smul.addr %s461, 128
        %v463 = vlaneseq
        %v464 = vand.u32 %v463, 127
        %v465 = vstv %s462
        %v466 = vadd.s32 %v464, %v465
        %vm467 = vcmp.lt.s32.totalorder %v466, 2080
        %v468 = vsel %vm467, %v459, %v18
        %s469 = scalar_lea.vmem [#allocation10], 8
        %v470 = vpack.c.bf16 0.0, %v468
        %s472 = ssub.s32 16, 1
        %473 = vst [vmem:[%s469] sm:%s472] %v470
        %s474 = scalar_lea.vmem %s413, 12
        %v475 = vld [vmem:[%s474] sm:$0xf]
        %v476 = vunpack.c.l.bf16 %v475
        %v477 = vunpack.c.h.bf16 %v475
        %s478 = sadd.s32 %s414, 3
        %s479 = smul.addr %s478, 128
        %v480 = vlaneseq
        %v481 = vand.u32 %v480, 127
        %v482 = vstv %s479
        %v483 = vadd.s32 %v481, %v482
        %vm484 = vcmp.lt.s32.totalorder %v483, 2080
        %v485 = vsel %vm484, %v476, %v18
        %s486 = scalar_lea.vmem [#allocation10], 12
        %v487 = vpack.c.bf16 0.0, %v485
        %s489 = ssub.s32 16, 1
        %490 = vst [vmem:[%s486] sm:%s489] %v487
        %s491 = scalar_lea.vmem %s413, 16
        %s492 = sadd.s32 %s414, 4
        %s493 = ssub.s32 16, %s492
        %p494 = scmp.lt.s32.totalorder %s493, 0
        %s495 = scalar_select %p494, 0, 255
        %s496 = sshrl.u32 %s495, 1
        %s497 = sor.u32 %s495, %s496
        %s498 = sand.u32 %s497, 85
        %s499 = sshrl.u32 %s498, 1
        %s500 = sor.u32 %s498, %s499
        %s501 = sand.u32 51, %s500
        %s502 = sshrl.u32 %s501, 2
        %s503 = sor.u32 %s501, %s502
        %s504 = sand.u32 15, %s503
        %v505 = vld [vmem:[%s491] sm:%s504]
        %v506 = vunpack.c.l.bf16 %v505
        %v507 = vunpack.c.h.bf16 %v505
        %s508 = sadd.s32 %s414, 4
        %s509 = ssub.s32 16, %s508
        %v510 = vstv %s509
        %vm511 = vcmp.lt.s32.totalorder %v510, 0
        %v512 = vsel %vm511, %v18, %v506
        %s513 = sadd.s32 %s414, 4
        %s514 = smul.addr %s513, 128
        %v515 = vlaneseq
        %v516 = vand.u32 %v515, 127
        %v517 = vstv %s514
        %v518 = vadd.s32 %v516, %v517
        %vm519 = vcmp.lt.s32.totalorder %v518, 2080
        %v520 = vsel %vm519, %v512, %v18
        %s521 = scalar_lea.vmem [#allocation10], 16
        %v522 = vpack.c.bf16 0.0, %v520
        %s524 = ssub.s32 16, 1
        %525 = vst [vmem:[%s521] sm:%s524] %v522
        %s526 = scalar_lea.vmem %s413, 20
        %s527 = sadd.s32 %s414, 5
        %s528 = ssub.s32 16, %s527
        %p529 = scmp.lt.s32.totalorder %s528, 0
        %s530 = scalar_select %p529, 0, 255
        %s531 = sshrl.u32 %s530, 1
        %s532 = sor.u32 %s530, %s531
        %s533 = sand.u32 %s532, 85
        %s534 = sshrl.u32 %s533, 1
        %s535 = sor.u32 %s533, %s534
        %s536 = sand.u32 51, %s535
        %s537 = sshrl.u32 %s536, 2
        %s538 = sor.u32 %s536, %s537
        %s539 = sand.u32 15, %s538
        %v540 = vld [vmem:[%s526] sm:%s539]
        %v541 = vunpack.c.l.bf16 %v540
        %v542 = vunpack.c.h.bf16 %v540
        %s543 = sadd.s32 %s414, 5
        %s544 = ssub.s32 16, %s543
        %v545 = vstv %s544
        %vm546 = vcmp.lt.s32.totalorder %v545, 0
        %v547 = vsel %vm546, %v18, %v541
        %s548 = sadd.s32 %s414, 5
        %s549 = smul.addr %s548, 128
        %v550 = vlaneseq
        %v551 = vand.u32 %v550, 127
        %v552 = vstv %s549
        %v553 = vadd.s32 %v551, %v552
        %vm554 = vcmp.lt.s32.totalorder %v553, 2080
        %v555 = vsel %vm554, %v547, %v18
        %s556 = scalar_lea.vmem [#allocation10], 20
        %v557 = vpack.c.bf16 0.0, %v555
        %s559 = ssub.s32 16, 1
        %560 = vst [vmem:[%s556] sm:%s559] %v557
        %s561 = scalar_lea.vmem %s413, 68
        %v562 = vld [vmem:[%s561] sm:$0xf]
        %v563 = vunpack.c.l.bf16 %v562
        %v564 = vunpack.c.h.bf16 %v562
        %s565 = smul.addr %s414, 128
        %v566 = vlaneseq
        %v567 = vand.u32 %v566, 127
        %v568 = vstv %s565
        %v569 = vadd.s32 %v567, %v568
        %vm570 = vcmp.lt.s32.totalorder %v569, 2080
        %v571 = vsel %vm570, %v563, %v18
        %s572 = scalar_lea.vmem [#allocation10], 24
        %v573 = vpack.c.bf16 0.0, %v571
        %s575 = ssub.s32 16, 1
        %576 = vst [vmem:[%s572] sm:%s575] %v573
        %s577 = scalar_lea.vmem %s413, 72
        %v578 = vld [vmem:[%s577] sm:$0xf]
        %v579 = vunpack.c.l.bf16 %v578
        %v580 = vunpack.c.h.bf16 %v578
        %s581 = sadd.s32 %s414, 1
        %s582 = smul.addr %s581, 128
        %v583 = vlaneseq
        %v584 = vand.u32 %v583, 127
        %v585 = vstv %s582
        %v586 = vadd.s32 %v584, %v585
        %vm587 = vcmp.lt.s32.totalorder %v586, 2080
        %v588 = vsel %vm587, %v579, %v18
        %s589 = scalar_lea.vmem [#allocation10], 28
        %v590 = vpack.c.bf16 0.0, %v588
        %s592 = ssub.s32 16, 1
        %593 = vst [vmem:[%s589] sm:%s592] %v590
        %s594 = scalar_lea.vmem %s413, 76
        %v595 = vld [vmem:[%s594] sm:$0xf]
        %v596 = vunpack.c.l.bf16 %v595
        %v597 = vunpack.c.h.bf16 %v595
        %s598 = sadd.s32 %s414, 2
        %s599 = smul.addr %s598, 128
        %v600 = vlaneseq
        %v601 = vand.u32 %v600, 127
        %v602 = vstv %s599
        %v603 = vadd.s32 %v601, %v602
        %vm604 = vcmp.lt.s32.totalorder %v603, 2080
        %v605 = vsel %vm604, %v596, %v18
        %s606 = scalar_lea.vmem [#allocation10], 32
        %v607 = vpack.c.bf16 0.0, %v605
        %s609 = ssub.s32 16, 1
        %610 = vst [vmem:[%s606] sm:%s609] %v607
        %s611 = scalar_lea.vmem %s413, 80
        %v612 = vld [vmem:[%s611] sm:$0xf]
        %v613 = vunpack.c.l.bf16 %v612
        %v614 = vunpack.c.h.bf16 %v612
        %s615 = sadd.s32 %s414, 3
        %s616 = smul.addr %s615, 128
        %v617 = vlaneseq
        %v618 = vand.u32 %v617, 127
        %v619 = vstv %s616
        %v620 = vadd.s32 %v618, %v619
        %vm621 = vcmp.lt.s32.totalorder %v620, 2080
        %v622 = vsel %vm621, %v613, %v18
        %s623 = scalar_lea.vmem [#allocation10], 36
        %v624 = vpack.c.bf16 0.0, %v622
        %s626 = ssub.s32 16, 1
        %627 = vst [vmem:[%s623] sm:%s626] %v624
        %s628 = scalar_lea.vmem %s413, 84
        %s629 = sadd.s32 %s414, 4
        %s630 = ssub.s32 16, %s629
        %p631 = scmp.lt.s32.totalorder %s630, 0
        %s632 = scalar_select %p631, 0, 255
        %s633 = sshrl.u32 %s632, 1
        %s634 = sor.u32 %s632, %s633
        %s635 = sand.u32 %s634, 85
        %s636 = sshrl.u32 %s635, 1
        %s637 = sor.u32 %s635, %s636
        %s638 = sand.u32 51, %s637
        %s639 = sshrl.u32 %s638, 2
        %s640 = sor.u32 %s638, %s639
        %s641 = sand.u32 15, %s640
        %v642 = vld [vmem:[%s628] sm:%s641]
        %v643 = vunpack.c.l.bf16 %v642
        %v644 = vunpack.c.h.bf16 %v642
        %s645 = sadd.s32 %s414, 4
        %s646 = ssub.s32 16, %s645
        %v647 = vstv %s646
        %vm648 = vcmp.lt.s32.totalorder %v647, 0
        %v649 = vsel %vm648, %v18, %v643
        %s650 = sadd.s32 %s414, 4
        %s651 = smul.addr %s650, 128
        %v652 = vlaneseq
        %v653 = vand.u32 %v652, 127
        %v654 = vstv %s651
        %v655 = vadd.s32 %v653, %v654
        %vm656 = vcmp.lt.s32.totalorder %v655, 2080
        %v657 = vsel %vm656, %v649, %v18
        %s658 = scalar_lea.vmem [#allocation10], 40
        %v659 = vpack.c.bf16 0.0, %v657
        %s661 = ssub.s32 16, 1
        %662 = vst [vmem:[%s658] sm:%s661] %v659
        %s663 = scalar_lea.vmem %s413, 88
        %s664 = sadd.s32 %s414, 5
        %s665 = ssub.s32 16, %s664
        %p666 = scmp.lt.s32.totalorder %s665, 0
        %s667 = scalar_select %p666, 0, 255
        %s668 = sshrl.u32 %s667, 1
        %s669 = sor.u32 %s667, %s668
        %s670 = sand.u32 %s669, 85
        %s671 = sshrl.u32 %s670, 1
        %s672 = sor.u32 %s670, %s671
        %s673 = sand.u32 51, %s672
        %s674 = sshrl.u32 %s673, 2
        %s675 = sor.u32 %s673, %s674
        %s676 = sand.u32 15, %s675
        %v677 = vld [vmem:[%s663] sm:%s676]
        %v678 = vunpack.c.l.bf16 %v677
        %v679 = vunpack.c.h.bf16 %v677
        %s680 = sadd.s32 %s414, 5
        %s681 = ssub.s32 16, %s680
        %v682 = vstv %s681
        %vm683 = vcmp.lt.s32.totalorder %v682, 0
        %v684 = vsel %vm683, %v18, %v678
        %s685 = sadd.s32 %s414, 5
        %s686 = smul.addr %s685, 128
        %v687 = vlaneseq
        %v688 = vand.u32 %v687, 127
        %v689 = vstv %s686
        %v690 = vadd.s32 %v688, %v689
        %vm691 = vcmp.lt.s32.totalorder %v690, 2080
        %v692 = vsel %vm691, %v684, %v18
        %s693 = scalar_lea.vmem [#allocation10], 44
        %v694 = vpack.c.bf16 0.0, %v692
        %s696 = ssub.s32 16, 1
        %697 = vst [vmem:[%s693] sm:%s696] %v694
        %s698 = scalar_lea.vmem %s413, 136
        %v699 = vld [vmem:[%s698] sm:$0xf]
        %v700 = vunpack.c.l.bf16 %v699
        %v701 = vunpack.c.h.bf16 %v699
        %s702 = smul.addr %s414, 128
        %v703 = vlaneseq
        %v704 = vand.u32 %v703, 127
        %v705 = vstv %s702
        %v706 = vadd.s32 %v704, %v705
        %vm707 = vcmp.lt.s32.totalorder %v706, 2080
        %v708 = vsel %vm707, %v700, %v18
        %s709 = scalar_lea.vmem [#allocation10], 48
        %v710 = vpack.c.bf16 0.0, %v708
        %s712 = ssub.s32 16, 1
        %713 = vst [vmem:[%s709] sm:%s712] %v710
        %s714 = scalar_lea.vmem %s413, 140
        %v715 = vld [vmem:[%s714] sm:$0xf]
        %v716 = vunpack.c.l.bf16 %v715
        %v717 = vunpack.c.h.bf16 %v715
        %s718 = sadd.s32 %s414, 1
        %s719 = smul.addr %s718, 128
        %v720 = vlaneseq
        %v721 = vand.u32 %v720, 127
        %v722 = vstv %s719
        %v723 = vadd.s32 %v721, %v722
        %vm724 = vcmp.lt.s32.totalorder %v723, 2080
        %v725 = vsel %vm724, %v716, %v18
        %s726 = scalar_lea.vmem [#allocation10], 52
        %v727 = vpack.c.bf16 0.0, %v725
        %s729 = ssub.s32 16, 1
        %730 = vst [vmem:[%s726] sm:%s729] %v727
        %s731 = scalar_lea.vmem %s413, 144
        %v732 = vld [vmem:[%s731] sm:$0xf]
        %v733 = vunpack.c.l.bf16 %v732
        %v734 = vunpack.c.h.bf16 %v732
        %s735 = sadd.s32 %s414, 2
        %s736 = smul.addr %s735, 128
        %v737 = vlaneseq
        %v738 = vand.u32 %v737, 127
        %v739 = vstv %s736
        %v740 = vadd.s32 %v738, %v739
        %vm741 = vcmp.lt.s32.totalorder %v740, 2080
        %v742 = vsel %vm741, %v733, %v18
        %s743 = scalar_lea.vmem [#allocation10], 56
        %v744 = vpack.c.bf16 0.0, %v742
        %s746 = ssub.s32 16, 1
        %747 = vst [vmem:[%s743] sm:%s746] %v744
        %s748 = scalar_lea.vmem %s413, 148
        %v749 = vld [vmem:[%s748] sm:$0xf]
        %v750 = vunpack.c.l.bf16 %v749
        %v751 = vunpack.c.h.bf16 %v749
        %s752 = sadd.s32 %s414, 3
        %s753 = smul.addr %s752, 128
        %v754 = vlaneseq
        %v755 = vand.u32 %v754, 127
        %v756 = vstv %s753
        %v757 = vadd.s32 %v755, %v756
        %vm758 = vcmp.lt.s32.totalorder %v757, 2080
        %v759 = vsel %vm758, %v750, %v18
        %s760 = scalar_lea.vmem [#allocation10], 60
        %v761 = vpack.c.bf16 0.0, %v759
        %s763 = ssub.s32 16, 1
        %764 = vst [vmem:[%s760] sm:%s763] %v761
        %s765 = scalar_lea.vmem %s413, 152
        %s766 = sadd.s32 %s414, 4
        %s767 = ssub.s32 16, %s766
        %p768 = scmp.lt.s32.totalorder %s767, 0
        %s769 = scalar_select %p768, 0, 255
        %s770 = sshrl.u32 %s769, 1
        %s771 = sor.u32 %s769, %s770
        %s772 = sand.u32 %s771, 85
        %s773 = sshrl.u32 %s772, 1
        %s774 = sor.u32 %s772, %s773
        %s775 = sand.u32 51, %s774
        %s776 = sshrl.u32 %s775, 2
        %s777 = sor.u32 %s775, %s776
        %s778 = sand.u32 15, %s777
        %v779 = vld [vmem:[%s765] sm:%s778]
        %v780 = vunpack.c.l.bf16 %v779
        %v781 = vunpack.c.h.bf16 %v779
        %s782 = sadd.s32 %s414, 4
        %s783 = ssub.s32 16, %s782
        %v784 = vstv %s783
        %vm785 = vcmp.lt.s32.totalorder %v784, 0
        %v786 = vsel %vm785, %v18, %v780
        %s787 = sadd.s32 %s414, 4
        %s788 = smul.addr %s787, 128
        %v789 = vlaneseq
        %v790 = vand.u32 %v789, 127
        %v791 = vstv %s788
        %v792 = vadd.s32 %v790, %v791
        %vm793 = vcmp.lt.s32.totalorder %v792, 2080
        %v794 = vsel %vm793, %v786, %v18
        %s795 = scalar_lea.vmem [#allocation10], 64
        %v796 = vpack.c.bf16 0.0, %v794
        %s798 = ssub.s32 16, 1
        %799 = vst [vmem:[%s795] sm:%s798] %v796
        %s800 = scalar_lea.vmem %s413, 156
        %s801 = sadd.s32 %s414, 5
        %s802 = ssub.s32 16, %s801
        %p803 = scmp.lt.s32.totalorder %s802, 0
        %s804 = scalar_select %p803, 0, 255
        %s805 = sshrl.u32 %s804, 1
        %s806 = sor.u32 %s804, %s805
        %s807 = sand.u32 %s806, 85
        %s808 = sshrl.u32 %s807, 1
        %s809 = sor.u32 %s807, %s808
        %s810 = sand.u32 51, %s809
        %s811 = sshrl.u32 %s810, 2
        %s812 = sor.u32 %s810, %s811
        %s813 = sand.u32 15, %s812
        %v814 = vld [vmem:[%s800] sm:%s813]
        %v815 = vunpack.c.l.bf16 %v814
        %v816 = vunpack.c.h.bf16 %v814
        %s817 = sadd.s32 %s414, 5
        %s818 = ssub.s32 16, %s817
        %v819 = vstv %s818
        %vm820 = vcmp.lt.s32.totalorder %v819, 0
        %v821 = vsel %vm820, %v18, %v815
        %s822 = sadd.s32 %s414, 5
        %s823 = smul.addr %s822, 128
        %v824 = vlaneseq
        %v825 = vand.u32 %v824, 127
        %v826 = vstv %s823
        %v827 = vadd.s32 %v825, %v826
        %vm828 = vcmp.lt.s32.totalorder %v827, 2080
        %v829 = vsel %vm828, %v821, %v18
        %s830 = scalar_lea.vmem [#allocation10], 68
        %v831 = vpack.c.bf16 0.0, %v829
        %s833 = ssub.s32 16, 1
        %834 = vst [vmem:[%s830] sm:%s833] %v831
        %s835 = scalar_lea.vmem %s413, 204
        %v836 = vld [vmem:[%s835] sm:$0xf]
        %v837 = vunpack.c.l.bf16 %v836
        %v838 = vunpack.c.h.bf16 %v836
        %s839 = smul.addr %s414, 128
        %v840 = vlaneseq
        %v841 = vand.u32 %v840, 127
        %v842 = vstv %s839
        %v843 = vadd.s32 %v841, %v842
        %vm844 = vcmp.lt.s32.totalorder %v843, 2080
        %v845 = vsel %vm844, %v837, %v18
        %s846 = scalar_lea.vmem [#allocation10], 72
        %v847 = vpack.c.bf16 0.0, %v845
        %s849 = ssub.s32 16, 1
        %850 = vst [vmem:[%s846] sm:%s849] %v847
        %s851 = scalar_lea.vmem %s413, 208
        %v852 = vld [vmem:[%s851] sm:$0xf]
        %v853 = vunpack.c.l.bf16 %v852
        %v854 = vunpack.c.h.bf16 %v852
        %s855 = sadd.s32 %s414, 1
        %s856 = smul.addr %s855, 128
        %v857 = vlaneseq
        %v858 = vand.u32 %v857, 127
        %v859 = vstv %s856
        %v860 = vadd.s32 %v858, %v859
        %vm861 = vcmp.lt.s32.totalorder %v860, 2080
        %v862 = vsel %vm861, %v853, %v18
        %s863 = scalar_lea.vmem [#allocation10], 76
        %v864 = vpack.c.bf16 0.0, %v862
        %s866 = ssub.s32 16, 1
        %867 = vst [vmem:[%s863] sm:%s866] %v864
        %s868 = scalar_lea.vmem %s413, 212
        %v869 = vld [vmem:[%s868] sm:$0xf]
        %v870 = vunpack.c.l.bf16 %v869
        %v871 = vunpack.c.h.bf16 %v869
        %s872 = sadd.s32 %s414, 2
        %s873 = smul.addr %s872, 128
        %v874 = vlaneseq
        %v875 = vand.u32 %v874, 127
        %v876 = vstv %s873
        %v877 = vadd.s32 %v875, %v876
        %vm878 = vcmp.lt.s32.totalorder %v877, 2080
        %v879 = vsel %vm878, %v870, %v18
        %s880 = scalar_lea.vmem [#allocation10], 80
        %v881 = vpack.c.bf16 0.0, %v879
        %s883 = ssub.s32 16, 1
        %884 = vst [vmem:[%s880] sm:%s883] %v881
        %s885 = scalar_lea.vmem %s413, 216
        %v886 = vld [vmem:[%s885] sm:$0xf]
        %v887 = vunpack.c.l.bf16 %v886
        %v888 = vunpack.c.h.bf16 %v886
        %s889 = sadd.s32 %s414, 3
        %s890 = smul.addr %s889, 128
        %v891 = vlaneseq
        %v892 = vand.u32 %v891, 127
        %v893 = vstv %s890
        %v894 = vadd.s32 %v892, %v893
        %vm895 = vcmp.lt.s32.totalorder %v894, 2080
        %v896 = vsel %vm895, %v887, %v18
        %s897 = scalar_lea.vmem [#allocation10], 84
        %v898 = vpack.c.bf16 0.0, %v896
        %s900 = ssub.s32 16, 1
        %901 = vst [vmem:[%s897] sm:%s900] %v898
        %s902 = scalar_lea.vmem %s413, 220
        %s903 = sadd.s32 %s414, 4
        %s904 = ssub.s32 16, %s903
        %p905 = scmp.lt.s32.totalorder %s904, 0
        %s906 = scalar_select %p905, 0, 255
        %s907 = sshrl.u32 %s906, 1
        %s908 = sor.u32 %s906, %s907
        %s909 = sand.u32 %s908, 85
        %s910 = sshrl.u32 %s909, 1
        %s911 = sor.u32 %s909, %s910
        %s912 = sand.u32 51, %s911
        %s913 = sshrl.u32 %s912, 2
        %s914 = sor.u32 %s912, %s913
        %s915 = sand.u32 15, %s914
        %v916 = vld [vmem:[%s902] sm:%s915]
        %v917 = vunpack.c.l.bf16 %v916
        %v918 = vunpack.c.h.bf16 %v916
        %s919 = sadd.s32 %s414, 4
        %s920 = ssub.s32 16, %s919
        %v921 = vstv %s920
        %vm922 = vcmp.lt.s32.totalorder %v921, 0
        %v923 = vsel %vm922, %v18, %v917
        %s924 = sadd.s32 %s414, 4
        %s925 = smul.addr %s924, 128
        %v926 = vlaneseq
        %v927 = vand.u32 %v926, 127
        %v928 = vstv %s925
        %v929 = vadd.s32 %v927, %v928
        %vm930 = vcmp.lt.s32.totalorder %v929, 2080
        %v931 = vsel %vm930, %v923, %v18
        %s932 = scalar_lea.vmem [#allocation10], 88
        %v933 = vpack.c.bf16 0.0, %v931
        %s935 = ssub.s32 16, 1
        %936 = vst [vmem:[%s932] sm:%s935] %v933
        %s937 = scalar_lea.vmem %s413, 224
        %s938 = sadd.s32 %s414, 5
        %s939 = ssub.s32 16, %s938
        %p940 = scmp.lt.s32.totalorder %s939, 0
        %s941 = scalar_select %p940, 0, 255
        %s942 = sshrl.u32 %s941, 1
        %s943 = sor.u32 %s941, %s942
        %s944 = sand.u32 %s943, 85
        %s945 = sshrl.u32 %s944, 1
        %s946 = sor.u32 %s944, %s945
        %s947 = sand.u32 51, %s946
        %s948 = sshrl.u32 %s947, 2
        %s949 = sor.u32 %s947, %s948
        %s950 = sand.u32 15, %s949
        %v951 = vld [vmem:[%s937] sm:%s950]
        %v952 = vunpack.c.l.bf16 %v951
        %v953 = vunpack.c.h.bf16 %v951
        %s954 = sadd.s32 %s414, 5
        %s955 = ssub.s32 16, %s954
        %v956 = vstv %s955
        %vm957 = vcmp.lt.s32.totalorder %v956, 0
        %v958 = vsel %vm957, %v18, %v952
        %s959 = sadd.s32 %s414, 5
        %s960 = smul.addr %s959, 128
        %v961 = vlaneseq
        %v962 = vand.u32 %v961, 127
        %v963 = vstv %s960
        %v964 = vadd.s32 %v962, %v963
        %vm965 = vcmp.lt.s32.totalorder %v964, 2080
        %v966 = vsel %vm965, %v958, %v18
        %s967 = scalar_lea.vmem [#allocation10], 92
        %v968 = vpack.c.bf16 0.0, %v966
        %s970 = ssub.s32 16, 1
        %971 = vst [vmem:[%s967] sm:%s970] %v968
        %p973 = scmp.eq.s32.totalorder %s29, 0
        // Predicated region
        $region65: #{neural_network_forward.2} parent=63 // pred_check
          %p974 = pneg %p973
        $region66: #{neural_network_forward.2} parent=63 // pred_check_branch
          %976 = sbr.rel (%p974) target = $region68
        $region67: #{neural_network_forward.2} parent=63 // pred_region
          %977 = vst [vmem:[#allocation2] sm:$0xf] 0.0
        $region68: #{neural_network_forward.2} parent=63 // pred_fallthru
          _
        %v978 = vld [vmem:[#allocation10] sm:$0xff]
        %v979 = vld [vmem:[#allocation10 + $0x8] sm:$0xff]
        %v980 = vld [vmem:[#allocation10 + $0x10] sm:$0xff]
        %v981 = vld [vmem:[#allocation10 + $0x18] sm:$0xff]
        %v982 = vld [vmem:[#allocation10 + $0x20] sm:$0xff]
        %v983 = vld [vmem:[#allocation10 + $0x28] sm:$0xff]
        %v984 = vld [vmem:[#allocation10 + $0x30] sm:$0xff]
        %v985 = vld [vmem:[#allocation10 + $0x38] sm:$0xff]
        %v986 = vld [vmem:[#allocation10 + $0x40] sm:$0xff]
        %v987 = vld [vmem:[#allocation10 + $0x48] sm:$0xff]
        %v988 = vld [vmem:[#allocation10 + $0x50] sm:$0xff]
        %v989 = vld [vmem:[#allocation10 + $0x58] sm:$0xff]
        %v1002 = vunpack.c.l.b16 %v978
        %v1003 = vunpack.c.h.b16 %v978
        %v1004 = vunpack.c.l.b16 %v979
        %v1005 = vunpack.c.h.b16 %v979
        %v1006 = vunpack.c.l.b16 %v980
        %v1007 = vunpack.c.h.b16 %v980
        %v1008 = vunpack.c.l.b16 %v981
        %v1009 = vunpack.c.h.b16 %v981
        %v1010 = vunpack.c.l.b16 %v982
        %v1011 = vunpack.c.h.b16 %v982
        %v1012 = vunpack.c.l.b16 %v983
        %v1013 = vunpack.c.h.b16 %v983
        %v1014 = vunpack.c.l.b16 %v984
        %v1015 = vunpack.c.h.b16 %v984
        %v1016 = vunpack.c.l.b16 %v985
        %v1017 = vunpack.c.h.b16 %v985
        %v1018 = vunpack.c.l.b16 %v986
        %v1019 = vunpack.c.h.b16 %v986
        %v1020 = vunpack.c.l.b16 %v987
        %v1021 = vunpack.c.h.b16 %v987
        %v1022 = vunpack.c.l.b16 %v988
        %v1023 = vunpack.c.h.b16 %v988
        %v1024 = vunpack.c.l.b16 %v989
        %v1025 = vunpack.c.h.b16 %v989
        %v1026 = vpack.c.b16 %v1008, %v1002
        %v1027 = vpack.c.b16 %v1009, %v1003
        %v1028 = vpack.c.b16 %v1010, %v1004
        %v1029 = vpack.c.b16 %v1011, %v1005
        %v1030 = vpack.c.b16 %v1012, %v1006
        %v1031 = vpack.c.b16 %v1013, %v1007
        %v1032 = vpack.c.b16 %v1020, %v1014
        %v1033 = vpack.c.b16 %v1021, %v1015
        %v1034 = vpack.c.b16 %v1022, %v1016
        %v1035 = vpack.c.b16 %v1023, %v1017
        %v1036 = vpack.c.b16 %v1024, %v1018
        %v1037 = vpack.c.b16 %v1025, %v1019
        %v1050 = vunpack.i.l.bf16 %v1026
        %v1051 = vunpack.i.h.bf16 %v1026
        %v1052 = vmax.f32 %v1050, %v1051
        %v1053 = vrot.slane %v1052, 4
        %v1054 = vmax.f32 %v1052, %v1053
        %v1055 = vrot.slane %v1054, 2
        %v1056 = vmax.f32 %v1054, %v1055
        %v1057 = vrot.slane %v1056, 1
        %v1058 = vmax.f32 %v1056, %v1057
        %v1059 = vpack.i.bf16 %v1058, %v1058
        %v1060 = vunpack.i.l.bf16 %v1027
        %v1061 = vunpack.i.h.bf16 %v1027
        %v1062 = vmax.f32 %v1060, %v1061
        %v1063 = vrot.slane %v1062, 4
        %v1064 = vmax.f32 %v1062, %v1063
        %v1065 = vrot.slane %v1064, 2
        %v1066 = vmax.f32 %v1064, %v1065
        %v1067 = vrot.slane %v1066, 1
        %v1068 = vmax.f32 %v1066, %v1067
        %v1069 = vpack.i.bf16 %v1068, %v1068
        %v1070 = vunpack.i.l.bf16 %v1028
        %v1071 = vunpack.i.h.bf16 %v1028
        %v1072 = vmax.f32 %v1070, %v1071
        %v1073 = vrot.slane %v1072, 4
        %v1074 = vmax.f32 %v1072, %v1073
        %v1075 = vrot.slane %v1074, 2
        %v1076 = vmax.f32 %v1074, %v1075
        %v1077 = vrot.slane %v1076, 1
        %v1078 = vmax.f32 %v1076, %v1077
        %v1079 = vpack.i.bf16 %v1078, %v1078
        %v1080 = vunpack.i.l.bf16 %v1029
        %v1081 = vunpack.i.h.bf16 %v1029
        %v1082 = vmax.f32 %v1080, %v1081
        %v1083 = vrot.slane %v1082, 4
        %v1084 = vmax.f32 %v1082, %v1083
        %v1085 = vrot.slane %v1084, 2
        %v1086 = vmax.f32 %v1084, %v1085
        %v1087 = vrot.slane %v1086, 1
        %v1088 = vmax.f32 %v1086, %v1087
        %v1089 = vpack.i.bf16 %v1088, %v1088
        %v1090 = vunpack.i.l.bf16 %v1030
        %v1091 = vunpack.i.h.bf16 %v1030
        %v1092 = vmax.f32 %v1090, %v1091
        %v1093 = vrot.slane %v1092, 4
        %v1094 = vmax.f32 %v1092, %v1093
        %v1095 = vrot.slane %v1094, 2
        %v1096 = vmax.f32 %v1094, %v1095
        %v1097 = vrot.slane %v1096, 1
        %v1098 = vmax.f32 %v1096, %v1097
        %v1099 = vpack.i.bf16 %v1098, %v1098
        %v1100 = vunpack.i.l.bf16 %v1031
        %v1101 = vunpack.i.h.bf16 %v1031
        %v1102 = vmax.f32 %v1100, %v1101
        %v1103 = vrot.slane %v1102, 4
        %v1104 = vmax.f32 %v1102, %v1103
        %v1105 = vrot.slane %v1104, 2
        %v1106 = vmax.f32 %v1104, %v1105
        %v1107 = vrot.slane %v1106, 1
        %v1108 = vmax.f32 %v1106, %v1107
        %v1109 = vpack.i.bf16 %v1108, %v1108
        %v1110 = vunpack.i.l.bf16 %v1032
        %v1111 = vunpack.i.h.bf16 %v1032
        %v1112 = vmax.f32 %v1110, %v1111
        %v1113 = vrot.slane %v1112, 4
        %v1114 = vmax.f32 %v1112, %v1113
        %v1115 = vrot.slane %v1114, 2
        %v1116 = vmax.f32 %v1114, %v1115
        %v1117 = vrot.slane %v1116, 1
        %v1118 = vmax.f32 %v1116, %v1117
        %v1119 = vpack.i.bf16 %v1118, %v1118
        %v1120 = vunpack.i.l.bf16 %v1033
        %v1121 = vunpack.i.h.bf16 %v1033
        %v1122 = vmax.f32 %v1120, %v1121
        %v1123 = vrot.slane %v1122, 4
        %v1124 = vmax.f32 %v1122, %v1123
        %v1125 = vrot.slane %v1124, 2
        %v1126 = vmax.f32 %v1124, %v1125
        %v1127 = vrot.slane %v1126, 1
        %v1128 = vmax.f32 %v1126, %v1127
        %v1129 = vpack.i.bf16 %v1128, %v1128
        %v1130 = vunpack.i.l.bf16 %v1034
        %v1131 = vunpack.i.h.bf16 %v1034
        %v1132 = vmax.f32 %v1130, %v1131
        %v1133 = vrot.slane %v1132, 4
        %v1134 = vmax.f32 %v1132, %v1133
        %v1135 = vrot.slane %v1134, 2
        %v1136 = vmax.f32 %v1134, %v1135
        %v1137 = vrot.slane %v1136, 1
        %v1138 = vmax.f32 %v1136, %v1137
        %v1139 = vpack.i.bf16 %v1138, %v1138
        %v1140 = vunpack.i.l.bf16 %v1035
        %v1141 = vunpack.i.h.bf16 %v1035
        %v1142 = vmax.f32 %v1140, %v1141
        %v1143 = vrot.slane %v1142, 4
        %v1144 = vmax.f32 %v1142, %v1143
        %v1145 = vrot.slane %v1144, 2
        %v1146 = vmax.f32 %v1144, %v1145
        %v1147 = vrot.slane %v1146, 1
        %v1148 = vmax.f32 %v1146, %v1147
        %v1149 = vpack.i.bf16 %v1148, %v1148
        %v1150 = vunpack.i.l.bf16 %v1036
        %v1151 = vunpack.i.h.bf16 %v1036
        %v1152 = vmax.f32 %v1150, %v1151
        %v1153 = vrot.slane %v1152, 4
        %v1154 = vmax.f32 %v1152, %v1153
        %v1155 = vrot.slane %v1154, 2
        %v1156 = vmax.f32 %v1154, %v1155
        %v1157 = vrot.slane %v1156, 1
        %v1158 = vmax.f32 %v1156, %v1157
        %v1159 = vpack.i.bf16 %v1158, %v1158
        %v1160 = vunpack.i.l.bf16 %v1037
        %v1161 = vunpack.i.h.bf16 %v1037
        %v1162 = vmax.f32 %v1160, %v1161
        %v1163 = vrot.slane %v1162, 4
        %v1164 = vmax.f32 %v1162, %v1163
        %v1165 = vrot.slane %v1164, 2
        %v1166 = vmax.f32 %v1164, %v1165
        %v1167 = vrot.slane %v1166, 1
        %v1168 = vmax.f32 %v1166, %v1167
        %v1169 = vpack.i.bf16 %v1168, %v1168
        %v1170 = vld [vmem:[#allocation2] sm:$0xf]
        %v1171 = vld [vmem:[%s424] sm:$0xff]
        %v1172 = vld [vmem:[%s424 + $0x8] sm:$0xff]
        %v1173 = vld [vmem:[%s424 + $0x10] sm:$0xff]
        %v1174 = vld [vmem:[%s424 + $0x18] sm:$0xff]
        %v1175 = vld [vmem:[%s424 + $0x20] sm:$0xff]
        %v1176 = vld [vmem:[%s424 + $0x28] sm:$0xff]
        %v1177 = vld [vmem:[%s424 + $0x30] sm:$0xff]
        %v1178 = vld [vmem:[%s424 + $0x38] sm:$0xff]
        %v1179 = vld [vmem:[%s424 + $0x40] sm:$0xff]
        %v1180 = vld [vmem:[%s424 + $0x48] sm:$0xff]
        %v1181 = vld [vmem:[%s424 + $0x50] sm:$0xff]
        %v1182 = vld [vmem:[%s424 + $0x58] sm:$0xff]
        %v1183 = vld [vmem:[%s424 + $0x60] sm:$0xff]
        %v1184 = vld [vmem:[%s424 + $0x68] sm:$0xff]
        %v1185 = vld [vmem:[%s424 + $0x70] sm:$0xff]
        %v1186 = vld [vmem:[%s424 + $0x78] sm:$0xff]
        %v1187 = vld [vmem:[%s424 + $0x80] sm:$0xff]
        %v1188 = vld [vmem:[%s424 + $0x88] sm:$0xff]
        %v1189 = vld [vmem:[%s424 + $0x90] sm:$0xff]
        %v1190 = vld [vmem:[%s424 + $0x98] sm:$0xff]
        %v1191 = vld [vmem:[%s424 + $0xa0] sm:$0xff]
        %v1192 = vld [vmem:[%s424 + $0xa8] sm:$0xff]
        %v1193 = vld [vmem:[%s424 + $0xb0] sm:$0xff]
        %v1194 = vld [vmem:[%s424 + $0xb8] sm:$0xff]
        %v1195 = vld [vmem:[%s424 + $0xc0] sm:$0xff]
        %v1196 = vld [vmem:[%s424 + $0xc8] sm:$0xff]
        %v1197 = vld [vmem:[%s424 + $0xd0] sm:$0xff]
        %v1198 = vld [vmem:[%s424 + $0xd8] sm:$0xff]
        %v1199 = vld [vmem:[%s424 + $0xe0] sm:$0xff]
        %v1200 = vld [vmem:[%s424 + $0xe8] sm:$0xff]
        %v1201 = vld [vmem:[%s424 + $0xf0] sm:$0xff]
        %v1202 = vld [vmem:[%s424 + $0xf8] sm:$0xff]
        %v1203 = vld [vmem:[%s424 + $0x100] sm:$0xff]
        %v1204 = vld [vmem:[%s424 + $0x108] sm:$0xff]
        %v1205 = vld [vmem:[%s424 + $0x110] sm:$0xff]
        %v1206 = vld [vmem:[%s424 + $0x118] sm:$0xff]
        %v1207 = vld [vmem:[%s424 + $0x120] sm:$0xff]
        %v1208 = vld [vmem:[%s424 + $0x128] sm:$0xff]
        %v1209 = vld [vmem:[%s424 + $0x130] sm:$0xff]
        %v1210 = vld [vmem:[%s424 + $0x138] sm:$0xff]
        %v1211 = vld [vmem:[%s424 + $0x140] sm:$0xff]
        %v1212 = vld [vmem:[%s424 + $0x148] sm:$0xff]
        %v1213 = vld [vmem:[%s424 + $0x150] sm:$0xff]
        %v1214 = vld [vmem:[%s424 + $0x158] sm:$0xff]
        %v1215 = vld [vmem:[%s424 + $0x160] sm:$0xff]
        %v1216 = vld [vmem:[%s424 + $0x168] sm:$0xff]
        %v1217 = vld [vmem:[%s424 + $0x170] sm:$0xff]
        %v1218 = vld [vmem:[%s424 + $0x178] sm:$0xff]
        %v1219 = vld [vmem:[%s424 + $0x180] sm:$0xff]
        %v1220 = vld [vmem:[%s424 + $0x188] sm:$0xff]
        %v1221 = vld [vmem:[%s424 + $0x190] sm:$0xff]
        %v1222 = vld [vmem:[%s424 + $0x198] sm:$0xff]
        %v1223 = vld [vmem:[%s424 + $0x1a0] sm:$0xff]
        %v1224 = vld [vmem:[%s424 + $0x1a8] sm:$0xff]
        %v1225 = vld [vmem:[%s424 + $0x1b0] sm:$0xff]
        %v1226 = vld [vmem:[%s424 + $0x1b8] sm:$0xff]
        %v1227 = vld [vmem:[%s424 + $0x1c0] sm:$0xff]
        %v1228 = vld [vmem:[%s424 + $0x1c8] sm:$0xff]
        %v1229 = vld [vmem:[%s424 + $0x1d0] sm:$0xff]
        %v1230 = vld [vmem:[%s424 + $0x1d8] sm:$0xff]
        %v1231 = vld [vmem:[%s424 + $0x1e0] sm:$0xff]
        %v1232 = vld [vmem:[%s424 + $0x1e8] sm:$0xff]
        %v1233 = vld [vmem:[%s424 + $0x1f0] sm:$0xff]
        %v1234 = vld [vmem:[%s424 + $0x1f8] sm:$0xff]
        %v1235 = vld [vmem:[%s424 + $0x200] sm:$0xff]
        %v1236 = vld [vmem:[%s424 + $0x208] sm:$0xff]
        %v1237 = vld [vmem:[%s424 + $0x210] sm:$0xff]
        %v1238 = vld [vmem:[%s424 + $0x218] sm:$0xff]
        %v1239 = vld [vmem:[%s424 + $0x220] sm:$0xff]
        %v1240 = vld [vmem:[%s424 + $0x228] sm:$0xff]
        %v1241 = vld [vmem:[%s424 + $0x230] sm:$0xff]
        %v1242 = vld [vmem:[%s424 + $0x238] sm:$0xff]
        %v1243 = vld [vmem:[%s424 + $0x240] sm:$0xff]
        %v1244 = vld [vmem:[%s424 + $0x248] sm:$0xff]
        %v1245 = vld [vmem:[%s424 + $0x250] sm:$0xff]
        %v1246 = vld [vmem:[%s424 + $0x258] sm:$0xff]
        %v1247 = vld [vmem:[%s424 + $0x260] sm:$0xff]
        %v1248 = vld [vmem:[%s424 + $0x268] sm:$0xff]
        %v1249 = vld [vmem:[%s424 + $0x270] sm:$0xff]
        %v1250 = vld [vmem:[%s424 + $0x278] sm:$0xff]
        %v1251 = vld [vmem:[%s424 + $0x280] sm:$0xff]
        %v1252 = vld [vmem:[%s424 + $0x288] sm:$0xff]
        %v1253 = vld [vmem:[%s424 + $0x290] sm:$0xff]
        %v1254 = vld [vmem:[%s424 + $0x298] sm:$0xff]
        %v1255 = vld [vmem:[%s424 + $0x2a0] sm:$0xff]
        %v1256 = vld [vmem:[%s424 + $0x2a8] sm:$0xff]
        %v1257 = vld [vmem:[%s424 + $0x2b0] sm:$0xff]
        %v1258 = vld [vmem:[%s424 + $0x2b8] sm:$0xff]
        %v1259 = vld [vmem:[%s424 + $0x2c0] sm:$0xff]
        %v1260 = vld [vmem:[%s424 + $0x2c8] sm:$0xff]
        %v1261 = vld [vmem:[%s424 + $0x2d0] sm:$0xff]
        %v1262 = vld [vmem:[%s424 + $0x2d8] sm:$0xff]
        %v1263 = vld [vmem:[%s424 + $0x2e0] sm:$0xff]
        %v1264 = vld [vmem:[%s424 + $0x2e8] sm:$0xff]
        %v1265 = vld [vmem:[%s424 + $0x2f0] sm:$0xff]
        %v1266 = vld [vmem:[%s424 + $0x2f8] sm:$0xff]
        %v1279 = vunpack.c.l.b16 %v1059
        %v1280 = vunpack.c.l.b16 %v1069
        %v1281 = vunpack.c.l.b16 %v1079
        %v1282 = vunpack.c.l.b16 %v1089
        %v1283 = vunpack.c.l.b16 %v1099
        %v1284 = vunpack.c.l.b16 %v1109
        %v1285 = vunpack.c.l.b16 %v1119
        %v1286 = vunpack.c.l.b16 %v1129
        %v1287 = vunpack.c.l.b16 %v1139
        %v1288 = vunpack.c.l.b16 %v1149
        %v1289 = vunpack.c.l.b16 %v1159
        %v1290 = vunpack.c.l.b16 %v1169
        %vm1291 = vcmask 1041409
        %v1292 = vsel %vm1291, %v1285, %v1279
        %v1293 = vsel %vm1291, %v1286, %v1280
        %v1294 = vsel %vm1291, %v1287, %v1281
        %v1295 = vsel %vm1291, %v1288, %v1282
        %v1296 = vsel %vm1291, %v1289, %v1283
        %v1297 = vsel %vm1291, %v1290, %v1284
        %v1298 = vpack.c.b16 %v1292, %v1292
        %v1299 = vpack.c.b16 %v1293, %v1293
        %v1300 = vpack.c.b16 %v1294, %v1294
        %v1301 = vpack.c.b16 %v1295, %v1295
        %v1302 = vpack.c.b16 %v1296, %v1296
        %v1303 = vpack.c.b16 %v1297, %v1297
        %v1406 = vunpack.c.l.b16 %v1171
        %v1407 = vunpack.c.h.b16 %v1171
        %v1408 = vunpack.c.l.b16 %v1172
        %v1409 = vunpack.c.h.b16 %v1172
        %v1410 = vunpack.c.l.b16 %v1173
        %v1411 = vunpack.c.h.b16 %v1173
        %v1412 = vunpack.c.l.b16 %v1174
        %v1413 = vunpack.c.h.b16 %v1174
        %v1414 = vunpack.c.l.b16 %v1175
        %v1415 = vunpack.c.h.b16 %v1175
        %v1416 = vunpack.c.l.b16 %v1176
        %v1417 = vunpack.c.h.b16 %v1176
        %v1418 = vunpack.c.l.b16 %v1177
        %v1419 = vunpack.c.h.b16 %v1177
        %v1420 = vunpack.c.l.b16 %v1178
        %v1421 = vunpack.c.h.b16 %v1178
        %v1422 = vunpack.c.l.b16 %v1179
        %v1423 = vunpack.c.h.b16 %v1179
        %v1424 = vunpack.c.l.b16 %v1180
        %v1425 = vunpack.c.h.b16 %v1180
        %v1426 = vunpack.c.l.b16 %v1181
        %v1427 = vunpack.c.h.b16 %v1181
        %v1428 = vunpack.c.l.b16 %v1182
        %v1429 = vunpack.c.h.b16 %v1182
        %v1430 = vunpack.c.l.b16 %v1183
        %v1431 = vunpack.c.h.b16 %v1183
        %v1432 = vunpack.c.l.b16 %v1184
        %v1433 = vunpack.c.h.b16 %v1184
        %v1434 = vunpack.c.l.b16 %v1185
        %v1435 = vunpack.c.h.b16 %v1185
        %v1436 = vunpack.c.l.b16 %v1186
        %v1437 = vunpack.c.h.b16 %v1186
        %v1438 = vunpack.c.l.b16 %v1187
        %v1439 = vunpack.c.h.b16 %v1187
        %v1440 = vunpack.c.l.b16 %v1188
        %v1441 = vunpack.c.h.b16 %v1188
        %v1442 = vunpack.c.l.b16 %v1189
        %v1443 = vunpack.c.h.b16 %v1189
        %v1444 = vunpack.c.l.b16 %v1190
        %v1445 = vunpack.c.h.b16 %v1190
        %v1446 = vunpack.c.l.b16 %v1191
        %v1447 = vunpack.c.h.b16 %v1191
        %v1448 = vunpack.c.l.b16 %v1192
        %v1449 = vunpack.c.h.b16 %v1192
        %v1450 = vunpack.c.l.b16 %v1193
        %v1451 = vunpack.c.h.b16 %v1193
        %v1452 = vunpack.c.l.b16 %v1194
        %v1453 = vunpack.c.h.b16 %v1194
        %v1454 = vunpack.c.l.b16 %v1195
        %v1455 = vunpack.c.h.b16 %v1195
        %v1456 = vunpack.c.l.b16 %v1196
        %v1457 = vunpack.c.h.b16 %v1196
        %v1458 = vunpack.c.l.b16 %v1197
        %v1459 = vunpack.c.h.b16 %v1197
        %v1460 = vunpack.c.l.b16 %v1198
        %v1461 = vunpack.c.h.b16 %v1198
        %v1462 = vunpack.c.l.b16 %v1199
        %v1463 = vunpack.c.h.b16 %v1199
        %v1464 = vunpack.c.l.b16 %v1200
        %v1465 = vunpack.c.h.b16 %v1200
        %v1466 = vunpack.c.l.b16 %v1201
        %v1467 = vunpack.c.h.b16 %v1201
        %v1468 = vunpack.c.l.b16 %v1202
        %v1469 = vunpack.c.h.b16 %v1202
        %v1470 = vunpack.c.l.b16 %v1203
        %v1471 = vunpack.c.h.b16 %v1203
        %v1472 = vunpack.c.l.b16 %v1204
        %v1473 = vunpack.c.h.b16 %v1204
        %v1474 = vunpack.c.l.b16 %v1205
        %v1475 = vunpack.c.h.b16 %v1205
        %v1476 = vunpack.c.l.b16 %v1206
        %v1477 = vunpack.c.h.b16 %v1206
        %v1478 = vunpack.c.l.b16 %v1207
        %v1479 = vunpack.c.h.b16 %v1207
        %v1480 = vunpack.c.l.b16 %v1208
        %v1481 = vunpack.c.h.b16 %v1208
        %v1482 = vunpack.c.l.b16 %v1209
        %v1483 = vunpack.c.h.b16 %v1209
        %v1484 = vunpack.c.l.b16 %v1210
        %v1485 = vunpack.c.h.b16 %v1210
        %v1486 = vunpack.c.l.b16 %v1211
        %v1487 = vunpack.c.h.b16 %v1211
        %v1488 = vunpack.c.l.b16 %v1212
        %v1489 = vunpack.c.h.b16 %v1212
        %v1490 = vunpack.c.l.b16 %v1213
        %v1491 = vunpack.c.h.b16 %v1213
        %v1492 = vunpack.c.l.b16 %v1214
        %v1493 = vunpack.c.h.b16 %v1214
        %v1494 = vunpack.c.l.b16 %v1215
        %v1495 = vunpack.c.h.b16 %v1215
        %v1496 = vunpack.c.l.b16 %v1216
        %v1497 = vunpack.c.h.b16 %v1216
        %v1498 = vunpack.c.l.b16 %v1217
        %v1499 = vunpack.c.h.b16 %v1217
        %v1500 = vunpack.c.l.b16 %v1218
        %v1501 = vunpack.c.h.b16 %v1218
        %v1502 = vunpack.c.l.b16 %v1219
        %v1503 = vunpack.c.h.b16 %v1219
        %v1504 = vunpack.c.l.b16 %v1220
        %v1505 = vunpack.c.h.b16 %v1220
        %v1506 = vunpack.c.l.b16 %v1221
        %v1507 = vunpack.c.h.b16 %v1221
        %v1508 = vunpack.c.l.b16 %v1222
        %v1509 = vunpack.c.h.b16 %v1222
        %v1510 = vunpack.c.l.b16 %v1223
        %v1511 = vunpack.c.h.b16 %v1223
        %v1512 = vunpack.c.l.b16 %v1224
        %v1513 = vunpack.c.h.b16 %v1224
        %v1514 = vunpack.c.l.b16 %v1225
        %v1515 = vunpack.c.h.b16 %v1225
        %v1516 = vunpack.c.l.b16 %v1226
        %v1517 = vunpack.c.h.b16 %v1226
        %v1518 = vunpack.c.l.b16 %v1227
        %v1519 = vunpack.c.h.b16 %v1227
        %v1520 = vunpack.c.l.b16 %v1228
        %v1521 = vunpack.c.h.b16 %v1228
        %v1522 = vunpack.c.l.b16 %v1229
        %v1523 = vunpack.c.h.b16 %v1229
        %v1524 = vunpack.c.l.b16 %v1230
        %v1525 = vunpack.c.h.b16 %v1230
        %v1526 = vunpack.c.l.b16 %v1231
        %v1527 = vunpack.c.h.b16 %v1231
        %v1528 = vunpack.c.l.b16 %v1232
        %v1529 = vunpack.c.h.b16 %v1232
        %v1530 = vunpack.c.l.b16 %v1233
        %v1531 = vunpack.c.h.b16 %v1233
        %v1532 = vunpack.c.l.b16 %v1234
        %v1533 = vunpack.c.h.b16 %v1234
        %v1534 = vunpack.c.l.b16 %v1235
        %v1535 = vunpack.c.h.b16 %v1235
        %v1536 = vunpack.c.l.b16 %v1236
        %v1537 = vunpack.c.h.b16 %v1236
        %v1538 = vunpack.c.l.b16 %v1237
        %v1539 = vunpack.c.h.b16 %v1237
        %v1540 = vunpack.c.l.b16 %v1238
        %v1541 = vunpack.c.h.b16 %v1238
        %v1542 = vunpack.c.l.b16 %v1239
        %v1543 = vunpack.c.h.b16 %v1239
        %v1544 = vunpack.c.l.b16 %v1240
        %v1545 = vunpack.c.h.b16 %v1240
        %v1546 = vunpack.c.l.b16 %v1241
        %v1547 = vunpack.c.h.b16 %v1241
        %v1548 = vunpack.c.l.b16 %v1242
        %v1549 = vunpack.c.h.b16 %v1242
        %v1550 = vunpack.c.l.b16 %v1243
        %v1551 = vunpack.c.h.b16 %v1243
        %v1552 = vunpack.c.l.b16 %v1244
        %v1553 = vunpack.c.h.b16 %v1244
        %v1554 = vunpack.c.l.b16 %v1245
        %v1555 = vunpack.c.h.b16 %v1245
        %v1556 = vunpack.c.l.b16 %v1246
        %v1557 = vunpack.c.h.b16 %v1246
        %v1558 = vunpack.c.l.b16 %v1247
        %v1559 = vunpack.c.h.b16 %v1247
        %v1560 = vunpack.c.l.b16 %v1248
        %v1561 = vunpack.c.h.b16 %v1248
        %v1562 = vunpack.c.l.b16 %v1249
        %v1563 = vunpack.c.h.b16 %v1249
        %v1564 = vunpack.c.l.b16 %v1250
        %v1565 = vunpack.c.h.b16 %v1250
        %v1566 = vunpack.c.l.b16 %v1251
        %v1567 = vunpack.c.h.b16 %v1251
        %v1568 = vunpack.c.l.b16 %v1252
        %v1569 = vunpack.c.h.b16 %v1252
        %v1570 = vunpack.c.l.b16 %v1253
        %v1571 = vunpack.c.h.b16 %v1253
        %v1572 = vunpack.c.l.b16 %v1254
        %v1573 = vunpack.c.h.b16 %v1254
        %v1574 = vunpack.c.l.b16 %v1255
        %v1575 = vunpack.c.h.b16 %v1255
        %v1576 = vunpack.c.l.b16 %v1256
        %v1577 = vunpack.c.h.b16 %v1256
        %v1578 = vunpack.c.l.b16 %v1257
        %v1579 = vunpack.c.h.b16 %v1257
        %v1580 = vunpack.c.l.b16 %v1258
        %v1581 = vunpack.c.h.b16 %v1258
        %v1582 = vunpack.c.l.b16 %v1259
        %v1583 = vunpack.c.h.b16 %v1259
        %v1584 = vunpack.c.l.b16 %v1260
        %v1585 = vunpack.c.h.b16 %v1260
        %v1586 = vunpack.c.l.b16 %v1261
        %v1587 = vunpack.c.h.b16 %v1261
        %v1588 = vunpack.c.l.b16 %v1262
        %v1589 = vunpack.c.h.b16 %v1262
        %v1590 = vunpack.c.l.b16 %v1263
        %v1591 = vunpack.c.h.b16 %v1263
        %v1592 = vunpack.c.l.b16 %v1264
        %v1593 = vunpack.c.h.b16 %v1264
        %v1594 = vunpack.c.l.b16 %v1265
        %v1595 = vunpack.c.h.b16 %v1265
        %v1596 = vunpack.c.l.b16 %v1266
        %v1597 = vunpack.c.h.b16 %v1266
        %v1598 = vpack.c.b16 %v1408, %v1406
        %v1599 = vpack.c.b16 %v1409, %v1407
        %v1600 = vpack.c.b16 %v1412, %v1410
        %v1601 = vpack.c.b16 %v1413, %v1411
        %v1602 = vpack.c.b16 %v1416, %v1414
        %v1603 = vpack.c.b16 %v1417, %v1415
        %v1604 = vpack.c.b16 %v1420, %v1418
        %v1605 = vpack.c.b16 %v1421, %v1419
        %v1606 = vpack.c.b16 %v1424, %v1422
        %v1607 = vpack.c.b16 %v1425, %v1423
        %v1608 = vpack.c.b16 %v1428, %v1426
        %v1609 = vpack.c.b16 %v1429, %v1427
        %v1610 = vpack.c.b16 %v1432, %v1430
        %v1611 = vpack.c.b16 %v1433, %v1431
        %v1612 = vpack.c.b16 %v1436, %v1434
        %v1613 = vpack.c.b16 %v1437, %v1435
        %v1614 = vpack.c.b16 %v1440, %v1438
        %v1615 = vpack.c.b16 %v1441, %v1439
        %v1616 = vpack.c.b16 %v1444, %v1442
        %v1617 = vpack.c.b16 %v1445, %v1443
        %v1618 = vpack.c.b16 %v1448, %v1446
        %v1619 = vpack.c.b16 %v1449, %v1447
        %v1620 = vpack.c.b16 %v1452, %v1450
        %v1621 = vpack.c.b16 %v1453, %v1451
        %v1622 = vpack.c.b16 %v1456, %v1454
        %v1623 = vpack.c.b16 %v1457, %v1455
        %v1624 = vpack.c.b16 %v1460, %v1458
        %v1625 = vpack.c.b16 %v1461, %v1459
        %v1626 = vpack.c.b16 %v1464, %v1462
        %v1627 = vpack.c.b16 %v1465, %v1463
        %v1628 = vpack.c.b16 %v1468, %v1466
        %v1629 = vpack.c.b16 %v1469, %v1467
        %v1630 = vpack.c.b16 %v1472, %v1470
        %v1631 = vpack.c.b16 %v1473, %v1471
        %v1632 = vpack.c.b16 %v1476, %v1474
        %v1633 = vpack.c.b16 %v1477, %v1475
        %v1634 = vpack.c.b16 %v1480, %v1478
        %v1635 = vpack.c.b16 %v1481, %v1479
        %v1636 = vpack.c.b16 %v1484, %v1482
        %v1637 = vpack.c.b16 %v1485, %v1483
        %v1638 = vpack.c.b16 %v1488, %v1486
        %v1639 = vpack.c.b16 %v1489, %v1487
        %v1640 = vpack.c.b16 %v1492, %v1490
        %v1641 = vpack.c.b16 %v1493, %v1491
        %v1642 = vpack.c.b16 %v1496, %v1494
        %v1643 = vpack.c.b16 %v1497, %v1495
        %v1644 = vpack.c.b16 %v1500, %v1498
        %v1645 = vpack.c.b16 %v1501, %v1499
        %v1646 = vpack.c.b16 %v1504, %v1502
        %v1647 = vpack.c.b16 %v1505, %v1503
        %v1648 = vpack.c.b16 %v1508, %v1506
        %v1649 = vpack.c.b16 %v1509, %v1507
        %v1650 = vpack.c.b16 %v1512, %v1510
        %v1651 = vpack.c.b16 %v1513, %v1511
        %v1652 = vpack.c.b16 %v1516, %v1514
        %v1653 = vpack.c.b16 %v1517, %v1515
        %v1654 = vpack.c.b16 %v1520, %v1518
        %v1655 = vpack.c.b16 %v1521, %v1519
        %v1656 = vpack.c.b16 %v1524, %v1522
        %v1657 = vpack.c.b16 %v1525, %v1523
        %v1658 = vpack.c.b16 %v1528, %v1526
        %v1659 = vpack.c.b16 %v1529, %v1527
        %v1660 = vpack.c.b16 %v1532, %v1530
        %v1661 = vpack.c.b16 %v1533, %v1531
        %v1662 = vpack.c.b16 %v1536, %v1534
        %v1663 = vpack.c.b16 %v1537, %v1535
        %v1664 = vpack.c.b16 %v1540, %v1538
        %v1665 = vpack.c.b16 %v1541, %v1539
        %v1666 = vpack.c.b16 %v1544, %v1542
        %v1667 = vpack.c.b16 %v1545, %v1543
        %v1668 = vpack.c.b16 %v1548, %v1546
        %v1669 = vpack.c.b16 %v1549, %v1547
        %v1670 = vpack.c.b16 %v1552, %v1550
        %v1671 = vpack.c.b16 %v1553, %v1551
        %v1672 = vpack.c.b16 %v1556, %v1554
        %v1673 = vpack.c.b16 %v1557, %v1555
        %v1674 = vpack.c.b16 %v1560, %v1558
        %v1675 = vpack.c.b16 %v1561, %v1559
        %v1676 = vpack.c.b16 %v1564, %v1562
        %v1677 = vpack.c.b16 %v1565, %v1563
        %v1678 = vpack.c.b16 %v1568, %v1566
        %v1679 = vpack.c.b16 %v1569, %v1567
        %v1680 = vpack.c.b16 %v1572, %v1570
        %v1681 = vpack.c.b16 %v1573, %v1571
        %v1682 = vpack.c.b16 %v1576, %v1574
        %v1683 = vpack.c.b16 %v1577, %v1575
        %v1684 = vpack.c.b16 %v1580, %v1578
        %v1685 = vpack.c.b16 %v1581, %v1579
        %v1686 = vpack.c.b16 %v1584, %v1582
        %v1687 = vpack.c.b16 %v1585, %v1583
        %v1688 = vpack.c.b16 %v1588, %v1586
        %v1689 = vpack.c.b16 %v1589, %v1587
        %v1690 = vpack.c.b16 %v1592, %v1590
        %v1691 = vpack.c.b16 %v1593, %v1591
        %v1692 = vpack.c.b16 %v1596, %v1594
        %v1693 = vpack.c.b16 %v1597, %v1595
        %1790 = vmatprep.subr.bf16.mxu0 %v1613
        %1791 = vmatpush1.bf16.msra.mxu0 %v1612
        %1792 = vmatprep.subr.bf16.mxu0 %v1611
        %1793 = vmatpush1.bf16.msra.mxu0 %v1610
        %1794 = vmatprep.subr.bf16.mxu0 %v1609
        %1795 = vmatpush1.bf16.msra.mxu0 %v1608
        %1796 = vmatprep.subr.bf16.mxu0 %v1607
        %1797 = vmatpush1.bf16.msra.mxu0 %v1606
        %1798 = vmatprep.subr.bf16.mxu0 %v1605
        %1799 = vmatpush1.bf16.msra.mxu0 %v1604
        %1800 = vmatprep.subr.bf16.mxu0 %v1603
        %1801 = vmatpush1.bf16.msra.mxu0 %v1602
        %1802 = vmatprep.subr.bf16.mxu0 %v1601
        %1803 = vmatpush1.bf16.msra.mxu0 %v1600
        %1804 = vmatprep.subr.bf16.mxu0 %v1599
        %1805 = vmatpush1.bf16.msra.mxu0 %v1598
        %1806 = vmatprep.subr.bf16.mxu0 %v1629
        %1807 = vmatpush2.bf16.msra.mxu0 %v1628
        %1808 = vmatprep.subr.bf16.mxu0 %v1627
        %1809 = vmatpush2.bf16.msra.mxu0 %v1626
        %1810 = vmatprep.subr.bf16.mxu0 %v1625
        %1811 = vmatpush2.bf16.msra.mxu0 %v1624
        %1812 = vmatprep.subr.bf16.mxu0 %v1623
        %1813 = vmatpush2.bf16.msra.mxu0 %v1622
        %1814 = vmatprep.subr.bf16.mxu0 %v1621
        %1815 = vmatpush2.bf16.msra.mxu0 %v1620
        %1816 = vmatprep.subr.bf16.mxu0 %v1619
        %1817 = vmatpush2.bf16.msra.mxu0 %v1618
        %1818 = vmatprep.subr.bf16.mxu0 %v1617
        %1819 = vmatpush2.bf16.msra.mxu0 %v1616
        %1820 = vmatprep.subr.bf16.mxu0 %v1615
        %1821 = vmatpush2.bf16.msra.mxu0 %v1614
        %1822 = vmatprep.mubr.bf16.mxu0 %v1299
        %1823 = vmatmul.mubr.bf16.gmra.mxu0 %v1298
        %v1824 = vpop.f32.mrf.mxu0
        %v1825 = vadd.f32 0.0, %v1824
        %v1826 = vpop.f32.mrf.mxu0
        %v1827 = vadd.f32 0.0, %v1826
        %v1828 = vpop.f32.mrf.mxu0
        %v1829 = vpop.f32.mrf.mxu0
        %1830 = vdwg.mxu0
        %1831 = vmatprep.subr.bf16.mxu0 %v1645
        %1832 = vmatpush1.bf16.msra.mxu0 %v1644
        %1833 = vmatprep.subr.bf16.mxu0 %v1643
        %1834 = vmatpush1.bf16.msra.mxu0 %v1642
        %1835 = vmatprep.subr.bf16.mxu0 %v1641
        %1836 = vmatpush1.bf16.msra.mxu0 %v1640
        %1837 = vmatprep.subr.bf16.mxu0 %v1639
        %1838 = vmatpush1.bf16.msra.mxu0 %v1638
        %1839 = vmatprep.subr.bf16.mxu0 %v1637
        %1840 = vmatpush1.bf16.msra.mxu0 %v1636
        %1841 = vmatprep.subr.bf16.mxu0 %v1635
        %1842 = vmatpush1.bf16.msra.mxu0 %v1634
        %1843 = vmatprep.subr.bf16.mxu0 %v1633
        %1844 = vmatpush1.bf16.msra.mxu0 %v1632
        %1845 = vmatprep.subr.bf16.mxu0 %v1631
        %1846 = vmatpush1.bf16.msra.mxu0 %v1630
        %1847 = vmatprep.subr.bf16.mxu0 %v1661
        %1848 = vmatpush2.bf16.msra.mxu0 %v1660
        %1849 = vmatprep.subr.bf16.mxu0 %v1659
        %1850 = vmatpush2.bf16.msra.mxu0 %v1658
        %1851 = vmatprep.subr.bf16.mxu0 %v1657
        %1852 = vmatpush2.bf16.msra.mxu0 %v1656
        %1853 = vmatprep.subr.bf16.mxu0 %v1655
        %1854 = vmatpush2.bf16.msra.mxu0 %v1654
        %1855 = vmatprep.subr.bf16.mxu0 %v1653
        %1856 = vmatpush2.bf16.msra.mxu0 %v1652
        %1857 = vmatprep.subr.bf16.mxu0 %v1651
        %1858 = vmatpush2.bf16.msra.mxu0 %v1650
        %1859 = vmatprep.subr.bf16.mxu0 %v1649
        %1860 = vmatpush2.bf16.msra.mxu0 %v1648
        %1861 = vmatprep.subr.bf16.mxu0 %v1647
        %1862 = vmatpush2.bf16.msra.mxu0 %v1646
        %1863 = vmatprep.mubr.bf16.mxu0 %v1301
        %1864 = vmatmul.mubr.bf16.gmra.mxu0 %v1300
        %v1865 = vpop.f32.mrf.mxu0
        %v1866 = vadd.f32 %v1825, %v1865
        %v1867 = vpop.f32.mrf.mxu0
        %v1868 = vadd.f32 %v1827, %v1867
        %v1869 = vpop.f32.mrf.mxu0
        %v1870 = vpop.f32.mrf.mxu0
        %1871 = vdwg.mxu0
        %1872 = vmatprep.subr.bf16.mxu0 %v1677
        %1873 = vmatpush1.bf16.msra.mxu0 %v1676
        %1874 = vmatprep.subr.bf16.mxu0 %v1675
        %1875 = vmatpush1.bf16.msra.mxu0 %v1674
        %1876 = vmatprep.subr.bf16.mxu0 %v1673
        %1877 = vmatpush1.bf16.msra.mxu0 %v1672
        %1878 = vmatprep.subr.bf16.mxu0 %v1671
        %1879 = vmatpush1.bf16.msra.mxu0 %v1670
        %1880 = vmatprep.subr.bf16.mxu0 %v1669
        %1881 = vmatpush1.bf16.msra.mxu0 %v1668
        %1882 = vmatprep.subr.bf16.mxu0 %v1667
        %1883 = vmatpush1.bf16.msra.mxu0 %v1666
        %1884 = vmatprep.subr.bf16.mxu0 %v1665
        %1885 = vmatpush1.bf16.msra.mxu0 %v1664
        %1886 = vmatprep.subr.bf16.mxu0 %v1663
        %1887 = vmatpush1.bf16.msra.mxu0 %v1662
        %1888 = vmatprep.subr.bf16.mxu0 %v1693
        %1889 = vmatpush2.bf16.msra.mxu0 %v1692
        %1890 = vmatprep.subr.bf16.mxu0 %v1691
        %1891 = vmatpush2.bf16.msra.mxu0 %v1690
        %1892 = vmatprep.subr.bf16.mxu0 %v1689
        %1893 = vmatpush2.bf16.msra.mxu0 %v1688
        %1894 = vmatprep.subr.bf16.mxu0 %v1687
        %1895 = vmatpush2.bf16.msra.mxu0 %v1686
        %1896 = vmatprep.subr.bf16.mxu0 %v1685
        %1897 = vmatpush2.bf16.msra.mxu0 %v1684
        %1898 = vmatprep.subr.bf16.mxu0 %v1683
        %1899 = vmatpush2.bf16.msra.mxu0 %v1682
        %1900 = vmatprep.subr.bf16.mxu0 %v1681
        %1901 = vmatpush2.bf16.msra.mxu0 %v1680
        %1902 = vmatprep.subr.bf16.mxu0 %v1679
        %1903 = vmatpush2.bf16.msra.mxu0 %v1678
        %1904 = vmatprep.mubr.bf16.mxu0 %v1303
        %1905 = vmatmul.mubr.bf16.gmra.mxu0 %v1302
        %v1906 = vpop.f32.mrf.mxu0
        %v1907 = vadd.f32 %v1866, %v1906
        %v1908 = vpop.f32.mrf.mxu0
        %v1909 = vadd.f32 %v1868, %v1908
        %v1910 = vpop.f32.mrf.mxu0
        %v1911 = vpop.f32.mrf.mxu0
        %1912 = vdwg.mxu0
        %v1915 = vcombine.low %v1907, %v1909
        %v1917 = vunpack.c.l.s4 1983009808
        %v1918 = vunpack.c.0.s8 %v1917
        %v1919 = vlaneseq
        %v1920 = vshrl.u32 %v1919, 7
        %v1921 = vsub.s32 %v1918, %v1920
        %v1922 = vrot.slane %v1915, %v1921
        %v1924 = vadd.f32 %v1170, %v1922
        %1925 = vst [vmem:[#allocation2] sm:$0xf] %v1924
        %p1926 = scmp.eq.s32.totalorder %s29, 2
        // Predicated region
        $region69: #{neural_network_forward.2} parent=63 // pred_check
          %p1927 = pneg %p1926
        $region70: #{neural_network_forward.2} parent=63 // pred_check_branch
          %1929 = sbr.rel (%p1927) target = $region72
        $region71: #{neural_network_forward.2} parent=63 // pred_region
          %v1930 = vld [vmem:[#allocation2] sm:$0xf]
          %v1931 = vld [vmem:[%s1] sm:$0x3]
          %v1933 = vlaneseq
          %v1934 = vshrl.u32 %v1933, 7
          %v1935 = vsub.s32 0, %v1934
          %v1936 = vrot.slane %v1931, %v1935
          %v1937 = vlaneseq
          %v1938 = vshrl.u32 %v1937, 7
          %v1939 = vsub.s32 1, %v1938
          %v1940 = vrot.slane %v1931, %v1939
          %v1941 = vcombine.low %v1936, %v1940
          %v1943 = vunpack.c.l.s4 1983009808
          %v1944 = vunpack.c.0.s8 %v1943
          %v1945 = vlaneseq
          %v1946 = vshrl.u32 %v1945, 7
          %v1947 = vsub.s32 %v1944, %v1946
          %v1948 = vrot.slane %v1941, %v1947
          %v1950 = vadd.f32 %v1930, %v1948
          %v1951 = vmax.f32 %v1950, 0.0
          %v1954 = vunpack.c.l.s4 1983009808
          %v1955 = vunpack.c.0.s8 %v1954
          %v1956 = vlaneseq
          %v1957 = vshrl.u32 %v1956, 7
          %v1958 = vsub.s32 %v1955, %v1957
          %v1959 = vrot.slane %v1951, %v1958
          %v1960 = vcombine.high %v1959, %v1959
          %v1963 = vpack.c.bf16 %v1959, %v1959
          %v1964 = vpack.c.bf16 %v1960, %v1960
          %v1965 = vld [vmem:[%s2] sm:$0xff]
          %v1966 = vld [vmem:[%s2 + $0x8] sm:$0xff]
          %v1967 = vld [vmem:[%s2 + $0x10] sm:$0xff]
          %v1968 = vld [vmem:[%s2 + $0x18] sm:$0xff]
          %v1969 = vld [vmem:[%s2 + $0x20] sm:$0xff]
          %v1970 = vld [vmem:[%s2 + $0x28] sm:$0xff]
          %v1971 = vld [vmem:[%s2 + $0x30] sm:$0xff]
          %v1972 = vld [vmem:[%s2 + $0x38] sm:$0xff]
          %v1973 = vld [vmem:[%s2 + $0x40] sm:$0xff]
          %v1974 = vld [vmem:[%s2 + $0x48] sm:$0xff]
          %v1975 = vld [vmem:[%s2 + $0x50] sm:$0xff]
          %v1976 = vld [vmem:[%s2 + $0x58] sm:$0xff]
          %v1977 = vld [vmem:[%s2 + $0x60] sm:$0xff]
          %v1978 = vld [vmem:[%s2 + $0x68] sm:$0xff]
          %v1979 = vld [vmem:[%s2 + $0x70] sm:$0xff]
          %v1980 = vld [vmem:[%s2 + $0x78] sm:$0xff]
          %v1981 = vld [vmem:[%s2 + $0x80] sm:$0xff]
          %v1982 = vld [vmem:[%s2 + $0x88] sm:$0xff]
          %v1983 = vld [vmem:[%s2 + $0x90] sm:$0xff]
          %v1984 = vld [vmem:[%s2 + $0x98] sm:$0xff]
          %v1985 = vld [vmem:[%s2 + $0xa0] sm:$0xff]
          %v1986 = vld [vmem:[%s2 + $0xa8] sm:$0xff]
          %v1987 = vld [vmem:[%s2 + $0xb0] sm:$0xff]
          %v1988 = vld [vmem:[%s2 + $0xb8] sm:$0xff]
          %v1989 = vld [vmem:[%s2 + $0xc0] sm:$0xff]
          %v1990 = vld [vmem:[%s2 + $0xc8] sm:$0xff]
          %v1991 = vld [vmem:[%s2 + $0xd0] sm:$0xff]
          %v1992 = vld [vmem:[%s2 + $0xd8] sm:$0xff]
          %v1993 = vld [vmem:[%s2 + $0xe0] sm:$0xff]
          %v1994 = vld [vmem:[%s2 + $0xe8] sm:$0xff]
          %v1995 = vld [vmem:[%s2 + $0xf0] sm:$0xff]
          %v1996 = vld [vmem:[%s2 + $0xf8] sm:$0xff]
          %v1997 = vld [vmem:[%s3] sm:$0x3]
          %v1999 = vlaneseq
          %v2000 = vshrl.u32 %v1999, 7
          %v2001 = vsub.s32 0, %v2000
          %v2002 = vrot.slane %v1997, %v2001
          %v2003 = vlaneseq
          %v2004 = vshrl.u32 %v2003, 7
          %v2005 = vsub.s32 1, %v2004
          %v2006 = vrot.slane %v1997, %v2005
          %v2041 = vunpack.c.l.b16 %v1965
          %v2042 = vunpack.c.h.b16 %v1965
          %v2043 = vunpack.c.l.b16 %v1966
          %v2044 = vunpack.c.h.b16 %v1966
          %v2045 = vunpack.c.l.b16 %v1967
          %v2046 = vunpack.c.h.b16 %v1967
          %v2047 = vunpack.c.l.b16 %v1968
          %v2048 = vunpack.c.h.b16 %v1968
          %v2049 = vunpack.c.l.b16 %v1969
          %v2050 = vunpack.c.h.b16 %v1969
          %v2051 = vunpack.c.l.b16 %v1970
          %v2052 = vunpack.c.h.b16 %v1970
          %v2053 = vunpack.c.l.b16 %v1971
          %v2054 = vunpack.c.h.b16 %v1971
          %v2055 = vunpack.c.l.b16 %v1972
          %v2056 = vunpack.c.h.b16 %v1972
          %v2057 = vunpack.c.l.b16 %v1973
          %v2058 = vunpack.c.h.b16 %v1973
          %v2059 = vunpack.c.l.b16 %v1974
          %v2060 = vunpack.c.h.b16 %v1974
          %v2061 = vunpack.c.l.b16 %v1975
          %v2062 = vunpack.c.h.b16 %v1975
          %v2063 = vunpack.c.l.b16 %v1976
          %v2064 = vunpack.c.h.b16 %v1976
          %v2065 = vunpack.c.l.b16 %v1977
          %v2066 = vunpack.c.h.b16 %v1977
          %v2067 = vunpack.c.l.b16 %v1978
          %v2068 = vunpack.c.h.b16 %v1978
          %v2069 = vunpack.c.l.b16 %v1979
          %v2070 = vunpack.c.h.b16 %v1979
          %v2071 = vunpack.c.l.b16 %v1980
          %v2072 = vunpack.c.h.b16 %v1980
          %v2073 = vunpack.c.l.b16 %v1981
          %v2074 = vunpack.c.h.b16 %v1981
          %v2075 = vunpack.c.l.b16 %v1982
          %v2076 = vunpack.c.h.b16 %v1982
          %v2077 = vunpack.c.l.b16 %v1983
          %v2078 = vunpack.c.h.b16 %v1983
          %v2079 = vunpack.c.l.b16 %v1984
          %v2080 = vunpack.c.h.b16 %v1984
          %v2081 = vunpack.c.l.b16 %v1985
          %v2082 = vunpack.c.h.b16 %v1985
          %v2083 = vunpack.c.l.b16 %v1986
          %v2084 = vunpack.c.h.b16 %v1986
          %v2085 = vunpack.c.l.b16 %v1987
          %v2086 = vunpack.c.h.b16 %v1987
          %v2087 = vunpack.c.l.b16 %v1988
          %v2088 = vunpack.c.h.b16 %v1988
          %v2089 = vunpack.c.l.b16 %v1989
          %v2090 = vunpack.c.h.b16 %v1989
          %v2091 = vunpack.c.l.b16 %v1990
          %v2092 = vunpack.c.h.b16 %v1990
          %v2093 = vunpack.c.l.b16 %v1991
          %v2094 = vunpack.c.h.b16 %v1991
          %v2095 = vunpack.c.l.b16 %v1992
          %v2096 = vunpack.c.h.b16 %v1992
          %v2097 = vunpack.c.l.b16 %v1993
          %v2098 = vunpack.c.h.b16 %v1993
          %v2099 = vunpack.c.l.b16 %v1994
          %v2100 = vunpack.c.h.b16 %v1994
          %v2101 = vunpack.c.l.b16 %v1995
          %v2102 = vunpack.c.h.b16 %v1995
          %v2103 = vunpack.c.l.b16 %v1996
          %v2104 = vunpack.c.h.b16 %v1996
          %v2105 = vpack.c.b16 %v2043, %v2041
          %v2106 = vpack.c.b16 %v2044, %v2042
          %v2107 = vpack.c.b16 %v2047, %v2045
          %v2108 = vpack.c.b16 %v2048, %v2046
          %v2109 = vpack.c.b16 %v2051, %v2049
          %v2110 = vpack.c.b16 %v2052, %v2050
          %v2111 = vpack.c.b16 %v2055, %v2053
          %v2112 = vpack.c.b16 %v2056, %v2054
          %v2113 = vpack.c.b16 %v2059, %v2057
          %v2114 = vpack.c.b16 %v2060, %v2058
          %v2115 = vpack.c.b16 %v2063, %v2061
          %v2116 = vpack.c.b16 %v2064, %v2062
          %v2117 = vpack.c.b16 %v2067, %v2065
          %v2118 = vpack.c.b16 %v2068, %v2066
          %v2119 = vpack.c.b16 %v2071, %v2069
          %v2120 = vpack.c.b16 %v2072, %v2070
          %v2121 = vpack.c.b16 %v2075, %v2073
          %v2122 = vpack.c.b16 %v2076, %v2074
          %v2123 = vpack.c.b16 %v2079, %v2077
          %v2124 = vpack.c.b16 %v2080, %v2078
          %v2125 = vpack.c.b16 %v2083, %v2081
          %v2126 = vpack.c.b16 %v2084, %v2082
          %v2127 = vpack.c.b16 %v2087, %v2085
          %v2128 = vpack.c.b16 %v2088, %v2086
          %v2129 = vpack.c.b16 %v2091, %v2089
          %v2130 = vpack.c.b16 %v2092, %v2090
          %v2131 = vpack.c.b16 %v2095, %v2093
          %v2132 = vpack.c.b16 %v2096, %v2094
          %v2133 = vpack.c.b16 %v2099, %v2097
          %v2134 = vpack.c.b16 %v2100, %v2098
          %v2135 = vpack.c.b16 %v2103, %v2101
          %v2136 = vpack.c.b16 %v2104, %v2102
          %2169 = vmatprep.subr.bf16.mxu0 %v2120
          %2170 = vmatpush1.bf16.msra.mxu0 %v2119
          %2171 = vmatprep.subr.bf16.mxu0 %v2118
          %2172 = vmatpush1.bf16.msra.mxu0 %v2117
          %2173 = vmatprep.subr.bf16.mxu0 %v2116
          %2174 = vmatpush1.bf16.msra.mxu0 %v2115
          %2175 = vmatprep.subr.bf16.mxu0 %v2114
          %2176 = vmatpush1.bf16.msra.mxu0 %v2113
          %2177 = vmatprep.subr.bf16.mxu0 %v2112
          %2178 = vmatpush1.bf16.msra.mxu0 %v2111
          %2179 = vmatprep.subr.bf16.mxu0 %v2110
          %2180 = vmatpush1.bf16.msra.mxu0 %v2109
          %2181 = vmatprep.subr.bf16.mxu0 %v2108
          %2182 = vmatpush1.bf16.msra.mxu0 %v2107
          %2183 = vmatprep.subr.bf16.mxu0 %v2106
          %2184 = vmatpush1.bf16.msra.mxu0 %v2105
          %2185 = vmatprep.subr.bf16.mxu0 %v2136
          %2186 = vmatpush2.bf16.msra.mxu0 %v2135
          %2187 = vmatprep.subr.bf16.mxu0 %v2134
          %2188 = vmatpush2.bf16.msra.mxu0 %v2133
          %2189 = vmatprep.subr.bf16.mxu0 %v2132
          %2190 = vmatpush2.bf16.msra.mxu0 %v2131
          %2191 = vmatprep.subr.bf16.mxu0 %v2130
          %2192 = vmatpush2.bf16.msra.mxu0 %v2129
          %2193 = vmatprep.subr.bf16.mxu0 %v2128
          %2194 = vmatpush2.bf16.msra.mxu0 %v2127
          %2195 = vmatprep.subr.bf16.mxu0 %v2126
          %2196 = vmatpush2.bf16.msra.mxu0 %v2125
          %2197 = vmatprep.subr.bf16.mxu0 %v2124
          %2198 = vmatpush2.bf16.msra.mxu0 %v2123
          %2199 = vmatprep.subr.bf16.mxu0 %v2122
          %2200 = vmatpush2.bf16.msra.mxu0 %v2121
          %2201 = vmatprep.mubr.bf16.mxu0 %v1964
          %2202 = vmatmul.mubr.bf16.gmra.mxu0 %v1963
          %v2203 = vpop.f32.mrf.mxu0
          %v2204 = vadd.f32 %v2002, %v2203
          %v2205 = vpop.f32.mrf.mxu0
          %v2206 = vadd.f32 %v2006, %v2205
          %v2207 = vpop.f32.mrf.mxu0
          %v2208 = vpop.f32.mrf.mxu0
          %2209 = vdwg.mxu0
          %v2210 = vmax.f32 %v2204, 0.0
          %v2211 = vmax.f32 %v2206, 0.0
          %v2212 = vpack.c.bf16 %v2210, %v2210
          %v2213 = vpack.c.bf16 %v2211, %v2211
          %v2214 = vld [vmem:[%s4] sm:$0xff]
          %v2215 = vld [vmem:[%s4 + $0x8] sm:$0xff]
          %v2216 = vld [vmem:[%s4 + $0x10] sm:$0xff]
          %v2217 = vld [vmem:[%s4 + $0x18] sm:$0xff]
          %v2218 = vld [vmem:[%s4 + $0x20] sm:$0xff]
          %v2219 = vld [vmem:[%s4 + $0x28] sm:$0xff]
          %v2220 = vld [vmem:[%s4 + $0x30] sm:$0xff]
          %v2221 = vld [vmem:[%s4 + $0x38] sm:$0xff]
          %v2222 = vld [vmem:[%s4 + $0x40] sm:$0xff]
          %v2223 = vld [vmem:[%s4 + $0x48] sm:$0xff]
          %v2224 = vld [vmem:[%s4 + $0x50] sm:$0xff]
          %v2225 = vld [vmem:[%s4 + $0x58] sm:$0xff]
          %v2226 = vld [vmem:[%s4 + $0x60] sm:$0xff]
          %v2227 = vld [vmem:[%s4 + $0x68] sm:$0xff]
          %v2228 = vld [vmem:[%s4 + $0x70] sm:$0xff]
          %v2229 = vld [vmem:[%s4 + $0x78] sm:$0xff]
          %v2230 = vld [vmem:[%s4 + $0x80] sm:$0xff]
          %v2231 = vld [vmem:[%s4 + $0x88] sm:$0xff]
          %v2232 = vld [vmem:[%s4 + $0x90] sm:$0xff]
          %v2233 = vld [vmem:[%s4 + $0x98] sm:$0xff]
          %v2234 = vld [vmem:[%s4 + $0xa0] sm:$0xff]
          %v2235 = vld [vmem:[%s4 + $0xa8] sm:$0xff]
          %v2236 = vld [vmem:[%s4 + $0xb0] sm:$0xff]
          %v2237 = vld [vmem:[%s4 + $0xb8] sm:$0xff]
          %v2238 = vld [vmem:[%s4 + $0xc0] sm:$0xff]
          %v2239 = vld [vmem:[%s4 + $0xc8] sm:$0xff]
          %v2240 = vld [vmem:[%s4 + $0xd0] sm:$0xff]
          %v2241 = vld [vmem:[%s4 + $0xd8] sm:$0xff]
          %v2242 = vld [vmem:[%s4 + $0xe0] sm:$0xff]
          %v2243 = vld [vmem:[%s4 + $0xe8] sm:$0xff]
          %v2244 = vld [vmem:[%s4 + $0xf0] sm:$0xff]
          %v2245 = vld [vmem:[%s4 + $0xf8] sm:$0xff]
          %v2246 = vld [vmem:[%s5] sm:$0x3]
          %v2248 = vlaneseq
          %v2249 = vshrl.u32 %v2248, 7
          %v2250 = vsub.s32 0, %v2249
          %v2251 = vrot.slane %v2246, %v2250
          %v2252 = vlaneseq
          %v2253 = vshrl.u32 %v2252, 7
          %v2254 = vsub.s32 1, %v2253
          %v2255 = vrot.slane %v2246, %v2254
          %v2290 = vunpack.c.l.b16 %v2214
          %v2291 = vunpack.c.h.b16 %v2214
          %v2292 = vunpack.c.l.b16 %v2215
          %v2293 = vunpack.c.h.b16 %v2215
          %v2294 = vunpack.c.l.b16 %v2216
          %v2295 = vunpack.c.h.b16 %v2216
          %v2296 = vunpack.c.l.b16 %v2217
          %v2297 = vunpack.c.h.b16 %v2217
          %v2298 = vunpack.c.l.b16 %v2218
          %v2299 = vunpack.c.h.b16 %v2218
          %v2300 = vunpack.c.l.b16 %v2219
          %v2301 = vunpack.c.h.b16 %v2219
          %v2302 = vunpack.c.l.b16 %v2220
          %v2303 = vunpack.c.h.b16 %v2220
          %v2304 = vunpack.c.l.b16 %v2221
          %v2305 = vunpack.c.h.b16 %v2221
          %v2306 = vunpack.c.l.b16 %v2222
          %v2307 = vunpack.c.h.b16 %v2222
          %v2308 = vunpack.c.l.b16 %v2223
          %v2309 = vunpack.c.h.b16 %v2223
          %v2310 = vunpack.c.l.b16 %v2224
          %v2311 = vunpack.c.h.b16 %v2224
          %v2312 = vunpack.c.l.b16 %v2225
          %v2313 = vunpack.c.h.b16 %v2225
          %v2314 = vunpack.c.l.b16 %v2226
          %v2315 = vunpack.c.h.b16 %v2226
          %v2316 = vunpack.c.l.b16 %v2227
          %v2317 = vunpack.c.h.b16 %v2227
          %v2318 = vunpack.c.l.b16 %v2228
          %v2319 = vunpack.c.h.b16 %v2228
          %v2320 = vunpack.c.l.b16 %v2229
          %v2321 = vunpack.c.h.b16 %v2229
          %v2322 = vunpack.c.l.b16 %v2230
          %v2323 = vunpack.c.h.b16 %v2230
          %v2324 = vunpack.c.l.b16 %v2231
          %v2325 = vunpack.c.h.b16 %v2231
          %v2326 = vunpack.c.l.b16 %v2232
          %v2327 = vunpack.c.h.b16 %v2232
          %v2328 = vunpack.c.l.b16 %v2233
          %v2329 = vunpack.c.h.b16 %v2233
          %v2330 = vunpack.c.l.b16 %v2234
          %v2331 = vunpack.c.h.b16 %v2234
          %v2332 = vunpack.c.l.b16 %v2235
          %v2333 = vunpack.c.h.b16 %v2235
          %v2334 = vunpack.c.l.b16 %v2236
          %v2335 = vunpack.c.h.b16 %v2236
          %v2336 = vunpack.c.l.b16 %v2237
          %v2337 = vunpack.c.h.b16 %v2237
          %v2338 = vunpack.c.l.b16 %v2238
          %v2339 = vunpack.c.h.b16 %v2238
          %v2340 = vunpack.c.l.b16 %v2239
          %v2341 = vunpack.c.h.b16 %v2239
          %v2342 = vunpack.c.l.b16 %v2240
          %v2343 = vunpack.c.h.b16 %v2240
          %v2344 = vunpack.c.l.b16 %v2241
          %v2345 = vunpack.c.h.b16 %v2241
          %v2346 = vunpack.c.l.b16 %v2242
          %v2347 = vunpack.c.h.b16 %v2242
          %v2348 = vunpack.c.l.b16 %v2243
          %v2349 = vunpack.c.h.b16 %v2243
          %v2350 = vunpack.c.l.b16 %v2244
          %v2351 = vunpack.c.h.b16 %v2244
          %v2352 = vunpack.c.l.b16 %v2245
          %v2353 = vunpack.c.h.b16 %v2245
          %v2354 = vpack.c.b16 %v2292, %v2290
          %v2355 = vpack.c.b16 %v2293, %v2291
          %v2356 = vpack.c.b16 %v2296, %v2294
          %v2357 = vpack.c.b16 %v2297, %v2295
          %v2358 = vpack.c.b16 %v2300, %v2298
          %v2359 = vpack.c.b16 %v2301, %v2299
          %v2360 = vpack.c.b16 %v2304, %v2302
          %v2361 = vpack.c.b16 %v2305, %v2303
          %v2362 = vpack.c.b16 %v2308, %v2306
          %v2363 = vpack.c.b16 %v2309, %v2307
          %v2364 = vpack.c.b16 %v2312, %v2310
          %v2365 = vpack.c.b16 %v2313, %v2311
          %v2366 = vpack.c.b16 %v2316, %v2314
          %v2367 = vpack.c.b16 %v2317, %v2315
          %v2368 = vpack.c.b16 %v2320, %v2318
          %v2369 = vpack.c.b16 %v2321, %v2319
          %v2370 = vpack.c.b16 %v2324, %v2322
          %v2371 = vpack.c.b16 %v2325, %v2323
          %v2372 = vpack.c.b16 %v2328, %v2326
          %v2373 = vpack.c.b16 %v2329, %v2327
          %v2374 = vpack.c.b16 %v2332, %v2330
          %v2375 = vpack.c.b16 %v2333, %v2331
          %v2376 = vpack.c.b16 %v2336, %v2334
          %v2377 = vpack.c.b16 %v2337, %v2335
          %v2378 = vpack.c.b16 %v2340, %v2338
          %v2379 = vpack.c.b16 %v2341, %v2339
          %v2380 = vpack.c.b16 %v2344, %v2342
          %v2381 = vpack.c.b16 %v2345, %v2343
          %v2382 = vpack.c.b16 %v2348, %v2346
          %v2383 = vpack.c.b16 %v2349, %v2347
          %v2384 = vpack.c.b16 %v2352, %v2350
          %v2385 = vpack.c.b16 %v2353, %v2351
          %2418 = vmatprep.subr.bf16.mxu0 %v2369
          %2419 = vmatpush1.bf16.msra.mxu0 %v2368
          %2420 = vmatprep.subr.bf16.mxu0 %v2367
          %2421 = vmatpush1.bf16.msra.mxu0 %v2366
          %2422 = vmatprep.subr.bf16.mxu0 %v2365
          %2423 = vmatpush1.bf16.msra.mxu0 %v2364
          %2424 = vmatprep.subr.bf16.mxu0 %v2363
          %2425 = vmatpush1.bf16.msra.mxu0 %v2362
          %2426 = vmatprep.subr.bf16.mxu0 %v2361
          %2427 = vmatpush1.bf16.msra.mxu0 %v2360
          %2428 = vmatprep.subr.bf16.mxu0 %v2359
          %2429 = vmatpush1.bf16.msra.mxu0 %v2358
          %2430 = vmatprep.subr.bf16.mxu0 %v2357
          %2431 = vmatpush1.bf16.msra.mxu0 %v2356
          %2432 = vmatprep.subr.bf16.mxu0 %v2355
          %2433 = vmatpush1.bf16.msra.mxu0 %v2354
          %2434 = vmatprep.subr.bf16.mxu0 %v2385
          %2435 = vmatpush2.bf16.msra.mxu0 %v2384
          %2436 = vmatprep.subr.bf16.mxu0 %v2383
          %2437 = vmatpush2.bf16.msra.mxu0 %v2382
          %2438 = vmatprep.subr.bf16.mxu0 %v2381
          %2439 = vmatpush2.bf16.msra.mxu0 %v2380
          %2440 = vmatprep.subr.bf16.mxu0 %v2379
          %2441 = vmatpush2.bf16.msra.mxu0 %v2378
          %2442 = vmatprep.subr.bf16.mxu0 %v2377
          %2443 = vmatpush2.bf16.msra.mxu0 %v2376
          %2444 = vmatprep.subr.bf16.mxu0 %v2375
          %2445 = vmatpush2.bf16.msra.mxu0 %v2374
          %2446 = vmatprep.subr.bf16.mxu0 %v2373
          %2447 = vmatpush2.bf16.msra.mxu0 %v2372
          %2448 = vmatprep.subr.bf16.mxu0 %v2371
          %2449 = vmatpush2.bf16.msra.mxu0 %v2370
          %2450 = vmatprep.mubr.bf16.mxu0 %v2213
          %2451 = vmatmul.mubr.bf16.gmra.mxu0 %v2212
          %v2452 = vpop.f32.mrf.mxu0
          %v2453 = vadd.f32 %v2251, %v2452
          %v2454 = vpop.f32.mrf.mxu0
          %v2455 = vadd.f32 %v2255, %v2454
          %v2456 = vpop.f32.mrf.mxu0
          %v2457 = vpop.f32.mrf.mxu0
          %2458 = vdwg.mxu0
          %v2459 = vmax.f32 %v2453, 0.0
          %v2460 = vmax.f32 %v2455, 0.0
          %v2461 = vpack.c.bf16 %v2459, %v2459
          %v2462 = vpack.c.bf16 %v2460, %v2460
          %v2463 = vld [vmem:[%s6] sm:$0xff]
          %v2464 = vld [vmem:[%s6 + $0x8] sm:$0xff]
          %v2465 = vld [vmem:[%s6 + $0x10] sm:$0xff]
          %v2466 = vld [vmem:[%s6 + $0x18] sm:$0xff]
          %v2467 = vld [vmem:[%s6 + $0x20] sm:$0xff]
          %v2468 = vld [vmem:[%s6 + $0x28] sm:$0xff]
          %v2469 = vld [vmem:[%s6 + $0x30] sm:$0xff]
          %v2470 = vld [vmem:[%s6 + $0x38] sm:$0xff]
          %v2471 = vld [vmem:[%s6 + $0x40] sm:$0xff]
          %v2472 = vld [vmem:[%s6 + $0x48] sm:$0xff]
          %v2473 = vld [vmem:[%s6 + $0x50] sm:$0xff]
          %v2474 = vld [vmem:[%s6 + $0x58] sm:$0xff]
          %v2475 = vld [vmem:[%s6 + $0x60] sm:$0xff]
          %v2476 = vld [vmem:[%s6 + $0x68] sm:$0xff]
          %v2477 = vld [vmem:[%s6 + $0x70] sm:$0xff]
          %v2478 = vld [vmem:[%s6 + $0x78] sm:$0xff]
          %v2479 = vld [vmem:[%s6 + $0x80] sm:$0xff]
          %v2480 = vld [vmem:[%s6 + $0x88] sm:$0xff]
          %v2481 = vld [vmem:[%s6 + $0x90] sm:$0xff]
          %v2482 = vld [vmem:[%s6 + $0x98] sm:$0xff]
          %v2483 = vld [vmem:[%s6 + $0xa0] sm:$0xff]
          %v2484 = vld [vmem:[%s6 + $0xa8] sm:$0xff]
          %v2485 = vld [vmem:[%s6 + $0xb0] sm:$0xff]
          %v2486 = vld [vmem:[%s6 + $0xb8] sm:$0xff]
          %v2487 = vld [vmem:[%s6 + $0xc0] sm:$0xff]
          %v2488 = vld [vmem:[%s6 + $0xc8] sm:$0xff]
          %v2489 = vld [vmem:[%s6 + $0xd0] sm:$0xff]
          %v2490 = vld [vmem:[%s6 + $0xd8] sm:$0xff]
          %v2491 = vld [vmem:[%s6 + $0xe0] sm:$0xff]
          %v2492 = vld [vmem:[%s6 + $0xe8] sm:$0xff]
          %v2493 = vld [vmem:[%s6 + $0xf0] sm:$0xff]
          %v2494 = vld [vmem:[%s6 + $0xf8] sm:$0xff]
          %v2495 = vld [vmem:[%s7] sm:$0x3]
          %v2497 = vlaneseq
          %v2498 = vshrl.u32 %v2497, 7
          %v2499 = vsub.s32 0, %v2498
          %v2500 = vrot.slane %v2495, %v2499
          %v2501 = vlaneseq
          %v2502 = vshrl.u32 %v2501, 7
          %v2503 = vsub.s32 1, %v2502
          %v2504 = vrot.slane %v2495, %v2503
          %v2539 = vunpack.c.l.b16 %v2463
          %v2540 = vunpack.c.h.b16 %v2463
          %v2541 = vunpack.c.l.b16 %v2464
          %v2542 = vunpack.c.h.b16 %v2464
          %v2543 = vunpack.c.l.b16 %v2465
          %v2544 = vunpack.c.h.b16 %v2465
          %v2545 = vunpack.c.l.b16 %v2466
          %v2546 = vunpack.c.h.b16 %v2466
          %v2547 = vunpack.c.l.b16 %v2467
          %v2548 = vunpack.c.h.b16 %v2467
          %v2549 = vunpack.c.l.b16 %v2468
          %v2550 = vunpack.c.h.b16 %v2468
          %v2551 = vunpack.c.l.b16 %v2469
          %v2552 = vunpack.c.h.b16 %v2469
          %v2553 = vunpack.c.l.b16 %v2470
          %v2554 = vunpack.c.h.b16 %v2470
          %v2555 = vunpack.c.l.b16 %v2471
          %v2556 = vunpack.c.h.b16 %v2471
          %v2557 = vunpack.c.l.b16 %v2472
          %v2558 = vunpack.c.h.b16 %v2472
          %v2559 = vunpack.c.l.b16 %v2473
          %v2560 = vunpack.c.h.b16 %v2473
          %v2561 = vunpack.c.l.b16 %v2474
          %v2562 = vunpack.c.h.b16 %v2474
          %v2563 = vunpack.c.l.b16 %v2475
          %v2564 = vunpack.c.h.b16 %v2475
          %v2565 = vunpack.c.l.b16 %v2476
          %v2566 = vunpack.c.h.b16 %v2476
          %v2567 = vunpack.c.l.b16 %v2477
          %v2568 = vunpack.c.h.b16 %v2477
          %v2569 = vunpack.c.l.b16 %v2478
          %v2570 = vunpack.c.h.b16 %v2478
          %v2571 = vunpack.c.l.b16 %v2479
          %v2572 = vunpack.c.h.b16 %v2479
          %v2573 = vunpack.c.l.b16 %v2480
          %v2574 = vunpack.c.h.b16 %v2480
          %v2575 = vunpack.c.l.b16 %v2481
          %v2576 = vunpack.c.h.b16 %v2481
          %v2577 = vunpack.c.l.b16 %v2482
          %v2578 = vunpack.c.h.b16 %v2482
          %v2579 = vunpack.c.l.b16 %v2483
          %v2580 = vunpack.c.h.b16 %v2483
          %v2581 = vunpack.c.l.b16 %v2484
          %v2582 = vunpack.c.h.b16 %v2484
          %v2583 = vunpack.c.l.b16 %v2485
          %v2584 = vunpack.c.h.b16 %v2485
          %v2585 = vunpack.c.l.b16 %v2486
          %v2586 = vunpack.c.h.b16 %v2486
          %v2587 = vunpack.c.l.b16 %v2487
          %v2588 = vunpack.c.h.b16 %v2487
          %v2589 = vunpack.c.l.b16 %v2488
          %v2590 = vunpack.c.h.b16 %v2488
          %v2591 = vunpack.c.l.b16 %v2489
          %v2592 = vunpack.c.h.b16 %v2489
          %v2593 = vunpack.c.l.b16 %v2490
          %v2594 = vunpack.c.h.b16 %v2490
          %v2595 = vunpack.c.l.b16 %v2491
          %v2596 = vunpack.c.h.b16 %v2491
          %v2597 = vunpack.c.l.b16 %v2492
          %v2598 = vunpack.c.h.b16 %v2492
          %v2599 = vunpack.c.l.b16 %v2493
          %v2600 = vunpack.c.h.b16 %v2493
          %v2601 = vunpack.c.l.b16 %v2494
          %v2602 = vunpack.c.h.b16 %v2494
          %v2603 = vpack.c.b16 %v2541, %v2539
          %v2604 = vpack.c.b16 %v2542, %v2540
          %v2605 = vpack.c.b16 %v2545, %v2543
          %v2606 = vpack.c.b16 %v2546, %v2544
          %v2607 = vpack.c.b16 %v2549, %v2547
          %v2608 = vpack.c.b16 %v2550, %v2548
          %v2609 = vpack.c.b16 %v2553, %v2551
          %v2610 = vpack.c.b16 %v2554, %v2552
          %v2611 = vpack.c.b16 %v2557, %v2555
          %v2612 = vpack.c.b16 %v2558, %v2556
          %v2613 = vpack.c.b16 %v2561, %v2559
          %v2614 = vpack.c.b16 %v2562, %v2560
          %v2615 = vpack.c.b16 %v2565, %v2563
          %v2616 = vpack.c.b16 %v2566, %v2564
          %v2617 = vpack.c.b16 %v2569, %v2567
          %v2618 = vpack.c.b16 %v2570, %v2568
          %v2619 = vpack.c.b16 %v2573, %v2571
          %v2620 = vpack.c.b16 %v2574, %v2572
          %v2621 = vpack.c.b16 %v2577, %v2575
          %v2622 = vpack.c.b16 %v2578, %v2576
          %v2623 = vpack.c.b16 %v2581, %v2579
          %v2624 = vpack.c.b16 %v2582, %v2580
          %v2625 = vpack.c.b16 %v2585, %v2583
          %v2626 = vpack.c.b16 %v2586, %v2584
          %v2627 = vpack.c.b16 %v2589, %v2587
          %v2628 = vpack.c.b16 %v2590, %v2588
          %v2629 = vpack.c.b16 %v2593, %v2591
          %v2630 = vpack.c.b16 %v2594, %v2592
          %v2631 = vpack.c.b16 %v2597, %v2595
          %v2632 = vpack.c.b16 %v2598, %v2596
          %v2633 = vpack.c.b16 %v2601, %v2599
          %v2634 = vpack.c.b16 %v2602, %v2600
          %2667 = vmatprep.subr.bf16.mxu0 %v2618
          %2668 = vmatpush1.bf16.msra.mxu0 %v2617
          %2669 = vmatprep.subr.bf16.mxu0 %v2616
          %2670 = vmatpush1.bf16.msra.mxu0 %v2615
          %2671 = vmatprep.subr.bf16.mxu0 %v2614
          %2672 = vmatpush1.bf16.msra.mxu0 %v2613
          %2673 = vmatprep.subr.bf16.mxu0 %v2612
          %2674 = vmatpush1.bf16.msra.mxu0 %v2611
          %2675 = vmatprep.subr.bf16.mxu0 %v2610
          %2676 = vmatpush1.bf16.msra.mxu0 %v2609
          %2677 = vmatprep.subr.bf16.mxu0 %v2608
          %2678 = vmatpush1.bf16.msra.mxu0 %v2607
          %2679 = vmatprep.subr.bf16.mxu0 %v2606
          %2680 = vmatpush1.bf16.msra.mxu0 %v2605
          %2681 = vmatprep.subr.bf16.mxu0 %v2604
          %2682 = vmatpush1.bf16.msra.mxu0 %v2603
          %2683 = vmatprep.subr.bf16.mxu0 %v2634
          %2684 = vmatpush2.bf16.msra.mxu0 %v2633
          %2685 = vmatprep.subr.bf16.mxu0 %v2632
          %2686 = vmatpush2.bf16.msra.mxu0 %v2631
          %2687 = vmatprep.subr.bf16.mxu0 %v2630
          %2688 = vmatpush2.bf16.msra.mxu0 %v2629
          %2689 = vmatprep.subr.bf16.mxu0 %v2628
          %2690 = vmatpush2.bf16.msra.mxu0 %v2627
          %2691 = vmatprep.subr.bf16.mxu0 %v2626
          %2692 = vmatpush2.bf16.msra.mxu0 %v2625
          %2693 = vmatprep.subr.bf16.mxu0 %v2624
          %2694 = vmatpush2.bf16.msra.mxu0 %v2623
          %2695 = vmatprep.subr.bf16.mxu0 %v2622
          %2696 = vmatpush2.bf16.msra.mxu0 %v2621
          %2697 = vmatprep.subr.bf16.mxu0 %v2620
          %2698 = vmatpush2.bf16.msra.mxu0 %v2619
          %2699 = vmatprep.mubr.bf16.mxu0 %v2462
          %2700 = vmatmul.mubr.bf16.gmra.mxu0 %v2461
          %v2701 = vpop.f32.mrf.mxu0
          %v2702 = vadd.f32 %v2500, %v2701
          %v2703 = vpop.f32.mrf.mxu0
          %v2704 = vadd.f32 %v2504, %v2703
          %v2705 = vpop.f32.mrf.mxu0
          %v2706 = vpop.f32.mrf.mxu0
          %2707 = vdwg.mxu0
          %v2708 = vmax.f32 %v2702, 0.0
          %v2709 = vmax.f32 %v2704, 0.0
          %v2710 = vpack.c.bf16 %v2708, %v2708
          %v2711 = vpack.c.bf16 %v2709, %v2709
          %v2712 = vld [vmem:[%s8] sm:$0xf]
          %v2713 = vld [vmem:[%s8 + $0x4] sm:$0xf]
          %v2714 = vld [vmem:[%s8 + $0x8] sm:$0xf]
          %v2715 = vld [vmem:[%s8 + $0xc] sm:$0xf]
          %v2716 = vld [vmem:[%s8 + $0x10] sm:$0xf]
          %v2717 = vld [vmem:[%s8 + $0x14] sm:$0xf]
          %v2718 = vld [vmem:[%s8 + $0x18] sm:$0xf]
          %v2719 = vld [vmem:[%s8 + $0x1c] sm:$0xf]
          %v2720 = vld [vmem:[%s8 + $0x20] sm:$0xf]
          %v2721 = vld [vmem:[%s8 + $0x24] sm:$0xf]
          %v2722 = vld [vmem:[%s8 + $0x28] sm:$0xf]
          %v2723 = vld [vmem:[%s8 + $0x2c] sm:$0xf]
          %v2724 = vld [vmem:[%s8 + $0x30] sm:$0xf]
          %v2725 = vld [vmem:[%s8 + $0x34] sm:$0xf]
          %v2726 = vld [vmem:[%s8 + $0x38] sm:$0xf]
          %v2727 = vld [vmem:[%s8 + $0x3c] sm:$0xf]
          %v2728 = vld [vmem:[%s8 + $0x40] sm:$0xf]
          %v2729 = vld [vmem:[%s8 + $0x44] sm:$0xf]
          %v2730 = vld [vmem:[%s8 + $0x48] sm:$0xf]
          %v2731 = vld [vmem:[%s8 + $0x4c] sm:$0xf]
          %v2732 = vld [vmem:[%s8 + $0x50] sm:$0xf]
          %v2733 = vld [vmem:[%s8 + $0x54] sm:$0xf]
          %v2734 = vld [vmem:[%s8 + $0x58] sm:$0xf]
          %v2735 = vld [vmem:[%s8 + $0x5c] sm:$0xf]
          %v2736 = vld [vmem:[%s8 + $0x60] sm:$0xf]
          %v2737 = vld [vmem:[%s8 + $0x64] sm:$0xf]
          %v2738 = vld [vmem:[%s8 + $0x68] sm:$0xf]
          %v2739 = vld [vmem:[%s8 + $0x6c] sm:$0xf]
          %v2740 = vld [vmem:[%s8 + $0x70] sm:$0xf]
          %v2741 = vld [vmem:[%s8 + $0x74] sm:$0xf]
          %v2742 = vld [vmem:[%s8 + $0x78] sm:$0xf]
          %v2743 = vld [vmem:[%s8 + $0x7c] sm:$0xf]
          %v2744 = vld [vmem:[%s9] sm:$0x1]
          %v2746 = vlaneseq
          %v2747 = vshrl.u32 %v2746, 7
          %v2748 = vsub.s32 0, %v2747
          %v2749 = vrot.slane %v2744, %v2748
          %v2783 = vunpack.c.l.b16 %v2712
          %v2784 = vunpack.c.l.b16 %v2713
          %v2785 = vunpack.c.l.b16 %v2714
          %v2786 = vunpack.c.l.b16 %v2715
          %v2787 = vunpack.c.l.b16 %v2716
          %v2788 = vunpack.c.l.b16 %v2717
          %v2789 = vunpack.c.l.b16 %v2718
          %v2790 = vunpack.c.l.b16 %v2719
          %v2791 = vunpack.c.l.b16 %v2720
          %v2792 = vunpack.c.l.b16 %v2721
          %v2793 = vunpack.c.l.b16 %v2722
          %v2794 = vunpack.c.l.b16 %v2723
          %v2795 = vunpack.c.l.b16 %v2724
          %v2796 = vunpack.c.l.b16 %v2725
          %v2797 = vunpack.c.l.b16 %v2726
          %v2798 = vunpack.c.l.b16 %v2727
          %v2799 = vunpack.c.l.b16 %v2728
          %v2800 = vunpack.c.l.b16 %v2729
          %v2801 = vunpack.c.l.b16 %v2730
          %v2802 = vunpack.c.l.b16 %v2731
          %v2803 = vunpack.c.l.b16 %v2732
          %v2804 = vunpack.c.l.b16 %v2733
          %v2805 = vunpack.c.l.b16 %v2734
          %v2806 = vunpack.c.l.b16 %v2735
          %v2807 = vunpack.c.l.b16 %v2736
          %v2808 = vunpack.c.l.b16 %v2737
          %v2809 = vunpack.c.l.b16 %v2738
          %v2810 = vunpack.c.l.b16 %v2739
          %v2811 = vunpack.c.l.b16 %v2740
          %v2812 = vunpack.c.l.b16 %v2741
          %v2813 = vunpack.c.l.b16 %v2742
          %v2814 = vunpack.c.l.b16 %v2743
          %v2815 = vpack.c.b16 %v2784, %v2783
          %v2816 = vpack.c.b16 %v2786, %v2785
          %v2817 = vpack.c.b16 %v2788, %v2787
          %v2818 = vpack.c.b16 %v2790, %v2789
          %v2819 = vpack.c.b16 %v2792, %v2791
          %v2820 = vpack.c.b16 %v2794, %v2793
          %v2821 = vpack.c.b16 %v2796, %v2795
          %v2822 = vpack.c.b16 %v2798, %v2797
          %v2823 = vpack.c.b16 %v2800, %v2799
          %v2824 = vpack.c.b16 %v2802, %v2801
          %v2825 = vpack.c.b16 %v2804, %v2803
          %v2826 = vpack.c.b16 %v2806, %v2805
          %v2827 = vpack.c.b16 %v2808, %v2807
          %v2828 = vpack.c.b16 %v2810, %v2809
          %v2829 = vpack.c.b16 %v2812, %v2811
          %v2830 = vpack.c.b16 %v2814, %v2813
          %2847 = vmatprep.subr.bf16.mxu0 0
          %2848 = vmatpush1.bf16.msra.mxu0 %v2822
          %2849 = vmatprep.subr.bf16.mxu0 0
          %2850 = vmatpush1.bf16.msra.mxu0 %v2821
          %2851 = vmatprep.subr.bf16.mxu0 0
          %2852 = vmatpush1.bf16.msra.mxu0 %v2820
          %2853 = vmatprep.subr.bf16.mxu0 0
          %2854 = vmatpush1.bf16.msra.mxu0 %v2819
          %2855 = vmatprep.subr.bf16.mxu0 0
          %2856 = vmatpush1.bf16.msra.mxu0 %v2818
          %2857 = vmatprep.subr.bf16.mxu0 0
          %2858 = vmatpush1.bf16.msra.mxu0 %v2817
          %2859 = vmatprep.subr.bf16.mxu0 0
          %2860 = vmatpush1.bf16.msra.mxu0 %v2816
          %2861 = vmatprep.subr.bf16.mxu0 0
          %2862 = vmatpush1.bf16.msra.mxu0 %v2815
          %2863 = vmatprep.subr.bf16.mxu0 0
          %2864 = vmatpush2.bf16.msra.mxu0 %v2830
          %2865 = vmatprep.subr.bf16.mxu0 0
          %2866 = vmatpush2.bf16.msra.mxu0 %v2829
          %2867 = vmatprep.subr.bf16.mxu0 0
          %2868 = vmatpush2.bf16.msra.mxu0 %v2828
          %2869 = vmatprep.subr.bf16.mxu0 0
          %2870 = vmatpush2.bf16.msra.mxu0 %v2827
          %2871 = vmatprep.subr.bf16.mxu0 0
          %2872 = vmatpush2.bf16.msra.mxu0 %v2826
          %2873 = vmatprep.subr.bf16.mxu0 0
          %2874 = vmatpush2.bf16.msra.mxu0 %v2825
          %2875 = vmatprep.subr.bf16.mxu0 0
          %2876 = vmatpush2.bf16.msra.mxu0 %v2824
          %2877 = vmatprep.subr.bf16.mxu0 0
          %2878 = vmatpush2.bf16.msra.mxu0 %v2823
          %2879 = vmatprep.mubr.bf16.mxu0 %v2711
          %2880 = vmatmul.mubr.bf16.gmra.mxu0 %v2710
          %v2881 = vpop.f32.mrf.mxu0
          %v2882 = vadd.f32 %v2749, %v2881
          %v2883 = vpop.f32.mrf.mxu0
          %v2884 = vpop.f32.mrf.mxu0
          %v2885 = vpop.f32.mrf.mxu0
          %2886 = vdwg.mxu0
          %vm2887 = vcmask 41984
          %2888 = vst.msk [vmem:[#allocation8] sm:$0x3] %vm2887, %v2882
        $region72: #{neural_network_forward.2} parent=63 // pred_fallthru
          _
        // Predicated region
        $region73: #{neural_network_forward.2} parent=63 // pred_check
          %p2889 = pneg %p283
        $region74: #{neural_network_forward.2} parent=63 // pred_check_branch
          %2891 = sbr.rel (%p2889) target = $region76
        $region75: #{neural_network_forward.2} parent=63 // pred_region
          %s2893 = ssub.s32 32, 32
          %2894 = vsyncadd [#allocation9], %s2893
          %s2896 = sshll.u32 [#allocation8], 4
          %s2897 = int_to_ptr.vmem [resolvable:$true] %s2896
          %2899 = dma.vmem_to_hbm [thread:$0]  %s2897, 32, %s12, [#allocation9]
        $region76: #{neural_network_forward.2} parent=63 // pred_fallthru
          _
        // Predicated region
        $region77: #{neural_network_forward.2} parent=63 // pred_check
          %p2900 = pneg %p283
        $region78: #{neural_network_forward.2} parent=63 // pred_check_branch
          %2902 = sbr.rel (%p2900) target = $region80
        $region79: #{neural_network_forward.2} parent=63 // pred_region
          %2903 = dma.done [#allocation9], 32
        $region80: #{neural_network_forward.2} parent=63 // pred_fallthru
          _
      $region64: #{neural_network_forward.2} parent=5 // pred_fallthru
        _
      %p2904 = scmp.le.s32.totalorder 2, %s24
      // Predicated region
      $region81: #{neural_network_forward.2} parent=5 // pred_check
        %p2905 = pneg %p2904
      $region82: #{neural_network_forward.2} parent=5 // pred_check_branch
        %2907 = sbr.rel (%p2905) target = $region84
      $region83: #{neural_network_forward.2} parent=5 // pred_region
        %s2908 = ssub.s32 %s24, 2
      $region84: #{neural_network_forward.2} parent=5 // pred_fallthru
        _
    $region6: #{neural_network_forward.2} parent=1 // loop_footer
      %s28 = sadd.s32 1, %s24
    $region7: #{neural_network_forward.2} parent=1 // loop_footer_branch
      %23 = sbr.rel target = $region3
    $region8: #{neural_network_forward.2} parent=1 // loop_exit
      _
    %2909 = vsyncpa [#allocation9], 1
    %s2910 = scalar_lea.sflag [#allocation9], 1
    %2911 = vsyncpa %s2910, 1

</llo_original>
